<compile_context>
chip_gen: v5e
topology: v5e:2x2
jax: 0.10.0
libtpu: 0.0.40
codegen_flags: <defaults>
</compile_context>

<pallas_src>
import jax
import jax.numpy as jnp
from jax.experimental import pallas as pl
from jax.experimental.pallas import tpu as pltpu


# ----------------------------- helpers ------------------------------------- #

def _round_up(x, m):
    return (x + m - 1) // m * m


def _pick_tile(dim, max_tile, align=128):
    """Largest multiple of `align` that is <= max_tile and divides `dim`.

    `dim` must itself be a multiple of `align`.
    """
    t = max(align, (min(max_tile, dim) // align) * align)
    while dim % t:
        t -= align
    return t


def _position_order(num_layers, length_in):
    """True time index of each stored row after `num_layers` tap-stacking layers."""
    order = list(range(length_in))
    for _ in range(num_layers):
        order = [2 * t for t in order] + [2 * t + 1 for t in order]
    return order


# ------------------- fused ConvTranspose1d + ReLU stack --------------------- #

def _make_conv_stack_kernel(num_layers, batch):
    def kernel(*refs):
        x_ref = refs[0]
        wb = refs[1:1 + 2 * num_layers]
        o_ref = refs[1 + 2 * num_layers]
        scratch = refs[2 + 2 * num_layers:]
        for n in range(batch):                    # batch is tiny & static
            act = x_ref[n]                        # (P, Cin), rows = time positions
            for l in range(num_layers):
                w2 = wb[2 * l][...]               # (Cin, 2*Cout), columns tap-major
                b2 = wb[2 * l + 1][...]           # (1, 2*Cout)
                y = jnp.dot(act, w2, preferred_element_type=jnp.float32) + b2
                y = jnp.maximum(y, 0.0)           # ReLU
                cout = w2.shape[1] // 2
                p = act.shape[0]
                dst = o_ref if l == num_layers - 1 else scratch[l]
                # Stack tap 0 / tap 1 onto new rows (static slices only).  The
                # resulting position order is fixed up by the one-time Linear
                # weight row permutation.
                dst[n, 0:p, :] = y[:, 0:cout].astype(dst.dtype)
                dst[n, p:2 * p, :] = y[:, cout:2 * cout].astype(dst.dtype)
                if l < num_layers - 1:
                    act = scratch[l][n]           # (2P, Cout)
    return kernel


def conv_stack(x_nlc, conv_params):
    """Fused ConvTranspose1d(k=2,s=2)+ReLU stack.

    x_nlc: (N, L0, C0).  Returns (N, P, Cfinal) with P = L0 * 2**len(conv_params);
    output row p holds true time position _position_order(...)[p].
    """
    n, l0, c0 = x_nlc.shape
    num_layers = len(conv_params)

    packed = []
    in_specs = [pl.BlockSpec((n, l0, c0), lambda i: (0, 0, 0))]
    scratch_shapes = []
    p = l0
    c_out = c0
    for idx, (w, b) in enumerate(conv_params):
        c_in, c_out, _k = w.shape
        # (Cin, Cout, 2) -> (Cin, 2, Cout) -> (Cin, 2*Cout): column = k*Cout + o
        w2 = jnp.transpose(w, (0, 2, 1)).reshape(c_in, 2 * c_out)
        b2 = jnp.concatenate([b, b]).reshape(1, 2 * c_out)
        packed += [w2, b2]
        in_specs += [pl.BlockSpec(w2.shape, lambda i: (0, 0)),
                     pl.BlockSpec(b2.shape, lambda i: (0, 0))]
        p *= 2
        if idx < num_layers - 1:
            scratch_shapes.append(pltpu.VMEM((n, p, c_out), jnp.float32))

    return pl.pallas_call(
        _make_conv_stack_kernel(num_layers, n),
        out_shape=jax.ShapeDtypeStruct((n, p, c_out), x_nlc.dtype),
        grid=(1,),
        in_specs=in_specs,
        out_specs=pl.BlockSpec((n, p, c_out), lambda i: (0, 0, 0)),
        scratch_shapes=scratch_shapes,
        compiler_params=pltpu.CompilerParams(dimension_semantics=("arbitrary",)),
    )(x_nlc, *packed)


# --------------------------- tiled final Linear ----------------------------- #

def _linear_kernel(x_ref, w_ref, b_ref, o_ref, acc_ref):
    k = pl.program_id(1)                          # reduction (F) axis, last grid dim

    @pl.when(k == 0)
    def _init():
        acc_ref[...] = jnp.zeros_like(acc_ref)

    acc_ref[...] += jnp.dot(x_ref[...], w_ref[...],
                            preferred_element_type=jnp.float32)

    @pl.when(k == pl.num_programs(1) - 1)
    def _finalize():
        o_ref[...] = (acc_ref[...] + b_ref[...]).astype(o_ref.dtype)


def linear_layer(x_flat, w_io, b_o, *, block_f=2048, block_o=512):
    """Tiled Linear: x_flat (N, F) @ w_io (F, O) + b_o (O,)."""
    n, f = x_flat.shape
    o = w_io.shape[1]

    f_pad = _round_up(f, 128)
    o_pad = _round_up(o, 128)                     # lane-dense output (2532 -> 2560)
    tk = _pick_tile(f_pad, block_f)
    tn = _pick_tile(o_pad, block_o)

    if f_pad != f:
        x_flat = jnp.pad(x_flat, ((0, 0), (0, f_pad - f)))
    if f_pad != f or o_pad != o:
        w_io = jnp.pad(w_io, ((0, f_pad - f), (0, o_pad - o)))
    b2 = (jnp.pad(b_o, (0, o_pad - o)) if o_pad != o else b_o).reshape(1, o_pad)

    out = pl.pallas_call(
        _linear_kernel,
        out_shape=jax.ShapeDtypeStruct((n, o_pad), x_flat.dtype),
        grid=(o_pad // tn, f_pad // tk),          # reduction axis last
        in_specs=[
            pl.BlockSpec((n, tk), lambda j, k: (0, k)),
            pl.BlockSpec((tk, tn), lambda j, k: (k, j)),
            pl.BlockSpec((1, tn), lambda j, k: (0, j)),
        ],
        out_specs=pl.BlockSpec((n, tn), lambda j, k: (0, j)),
        scratch_shapes=[pltpu.VMEM((n, tn), jnp.float32)],
        compiler_params=pltpu.CompilerParams(
            dimension_semantics=("parallel", "arbitrary"),
            vmem_limit_bytes=48 * 1024 * 1024),
    )(x_flat, w_io, b2)
    return out[:, :o]


# ------------------------------ full forward -------------------------------- #

def permute_linear_rows(lin_w, num_layers, length_in):
    """One-time weight prep: fold PyTorch's channel-major Flatten and the
    kernel's stacked-tap position order into a row permutation of lin_w."""
    f = lin_w.shape[0]
    l_fin = length_in * (2 ** num_layers)
    c_fin = f // l_fin
    order = jnp.asarray(_position_order(num_layers, length_in), dtype=jnp.int32)
    perm = (jnp.arange(c_fin, dtype=jnp.int32)[None, :] * l_fin
            + order[:, None]).reshape(-1)
    return lin_w[perm, :]


def destripe_forward(x_ncl, conv_params, lin_w_perm, lin_b, *,
                     block_f=2048, block_o=512):
    """DestripeNet forward. x_ncl: (N, Cin, L) (PyTorch NCL layout).
    lin_w_perm must be permute_linear_rows(lin_w, len(conv_params), L)."""
    x_nlc = jnp.transpose(x_ncl, (0, 2, 1))       # (N, L, C); tiny (L = 1 in model)
    act = conv_stack(x_nlc, conv_params)          # (N, P, Cfinal), VMEM-resident
    flat = act.reshape(act.shape[0], -1)          # contiguous reshape (free)
    return linear_layer(flat, lin_w_perm, lin_b, block_f=block_f, block_o=block_o)


# --------------------------- pure-JAX reference ------------------------------ #

def ref_forward(x_ncl, conv_params, lin_w, lin_b):
    x = x_ncl
    for (w, b) in conv_params:
        # out[n, o, 2t+k] = sum_c x[n, c, t] * w[c, o, k] + b[o]
        y = jnp.einsum('ncl,cok->nolk', x, w,
                       precision=jax.lax.Precision.HIGHEST)
        n_, c_out, l_, _ = y.shape
        y = y.reshape(n_, c_out, 2 * l_) + b[None, :, None]
        x = jnp.maximum(y, 0.0)
    flat = x.reshape(x.shape[0], -1)
    return jnp.dot(flat, lin_w, precision=jax.lax.Precision.HIGHEST) + lin_b[None, :]


# ---------------------------------- main ------------------------------------ #

if __name__ == "__main__":
    key = jax.random.PRNGKey(0)

    # Scaled-down DestripeNet config (same structure as the PyTorch module).
    # Real config: in_channels=38, features=[512]*8+[256,128,64,32,16],
    # Linear 131072 -> 2532 (which implies L_in = 1).  Kernels are size-agnostic.
    batch = 2
    in_channels = 38
    features = [64, 64, 32, 16]            # 4 ConvTranspose1d(k=2,s=2)+ReLU layers
    length_in = 1
    length_out = length_in * (2 ** len(features))
    flat_features = features[-1] * length_out      # analog of 131072
    out_features = 2532

    conv_params = []
    c_in = in_channels
    for feat in features:
        key, kw, kb = jax.random.split(key, 3)
        w = jax.random.normal(kw, (c_in, feat, 2), dtype=jnp.float32) * 0.1
        b = jax.random.normal(kb, (feat,), dtype=jnp.float32) * 0.05
        conv_params.append((w, b))
        c_in = feat

    key, kw, kb, kx = jax.random.split(key, 4)
    lin_w = jax.random.normal(kw, (flat_features, out_features), dtype=jnp.float32) * 0.05
    lin_b = jax.random.normal(kb, (out_features,), dtype=jnp.float32) * 0.05

    # Input in PyTorch NCL layout: (N, in_channels, L)
    x = jax.random.normal(kx, (batch, in_channels, length_in), dtype=jnp.float32)

    # One-time weight prep (off the critical path).
    lin_w_perm = permute_linear_rows(lin_w, len(features), length_in)

    # block_f=128 exercises the multi-step reduction at the toy F=256;
    # production defaults are block_f=2048, block_o=512.
    fwd = jax.jit(lambda inp: destripe_forward(
        inp, conv_params, lin_w_perm, lin_b, block_f=128, block_o=512))

    out = jax.block_until_ready(fwd(x))
    assert out.shape == (batch, out_features), out.shape

    ref = jax.block_until_ready(ref_forward(x, conv_params, lin_w, lin_b))
    assert jnp.allclose(out, ref, rtol=5e-3, atol=5e-3), \
        float(jnp.max(jnp.abs(out - ref)))

    print("KERNEL_OK")
</pallas_src>

<mosaic_0001>
module attributes {stable_mosaic.version = 11 : i64} {
  func.func @_linear_kernel(%arg0: i32, %arg1: i32, %arg2: memref<2x128xf32, #tpu.memory_space<vmem>>, %arg3: memref<128x512xf32, #tpu.memory_space<vmem>>, %arg4: memref<1x512xf32, #tpu.memory_space<vmem>>, %arg5: memref<2x512xf32, #tpu.memory_space<vmem>>, %arg6: memref<2x512xf32, #tpu.memory_space<vmem>>) attributes {dimension_semantics = [#tpu.dimension_semantics<parallel>, #tpu.dimension_semantics<arbitrary>], iteration_bounds = array<i64: 5, 2>, scalar_prefetch = 0 : i64, scratch_operands = 1 : i64, tpu.core_type = #tpu.core_type<tc>, window_params = [{transform_indices = @transform_0, window_bounds = array<i64: 2, 128>}, {transform_indices = @transform_1, window_bounds = array<i64: 128, 512>}, {transform_indices = @transform_2, window_bounds = array<i64: 1, 512>}, {transform_indices = @transform_3, window_bounds = array<i64: 2, 512>}]} {
    %c0_i32 = arith.constant 0 : i32
    %0 = arith.cmpi eq, %arg1, %c0_i32 : i32
    %1 = arith.extui %0 : i1 to i32
    %c0_i32_0 = arith.constant 0 : i32
    %2 = arith.cmpi ne, %1, %c0_i32_0 : i32
    scf.if %2 {
      %cst_9 = arith.constant 0.000000e+00 : f32
      %12 = vector.broadcast %cst_9 : f32 to vector<2x512xf32>
      %c0_10 = arith.constant 0 : index
      %c0_11 = arith.constant 0 : index
      %13 = vector.load %arg6[%c0_10, %c0_11] : memref<2x512xf32, #tpu.memory_space<vmem>>, vector<2x512xf32>
      tpu.vector_store %arg6[%c0_10, %c0_11], %12 {strides = array<i32>} : memref<2x512xf32, #tpu.memory_space<vmem>>, vector<2x512xf32>,
    } else {
    }
    %c0 = arith.constant 0 : index
    %c0_1 = arith.constant 0 : index
    %3 = vector.load %arg6[%c0, %c0_1] : memref<2x512xf32, #tpu.memory_space<vmem>>, vector<2x512xf32>
    %c0_2 = arith.constant 0 : index
    %c0_3 = arith.constant 0 : index
    %4 = vector.load %arg2[%c0_2, %c0_3] : memref<2x128xf32, #tpu.memory_space<vmem>>, vector<2x128xf32>
    %c0_4 = arith.constant 0 : index
    %c0_5 = arith.constant 0 : index
    %5 = vector.load %arg3[%c0_4, %c0_5] : memref<128x512xf32, #tpu.memory_space<vmem>>, vector<128x512xf32>
    %cst = arith.constant dense<0.000000e+00> : vector<2x512xf32>
    %6 = tpu.matmul %4, %5, %cst {dimension_numbers = #tpu.dot_dimension_numbers<[1], [0], [0], [1], [0, 0, 1, 1], [], []>} : vector<2x128xf32>, vector<128x512xf32>, vector<2x512xf32> -> vector<2x512xf32>
    %7 = arith.addf %3, %6 : vector<2x512xf32>
    %c0_6 = arith.constant 0 : index
    %c0_7 = arith.constant 0 : index
    %8 = vector.load %arg6[%c0_6, %c0_7] : memref<2x512xf32, #tpu.memory_space<vmem>>, vector<2x512xf32>
    tpu.vector_store %arg6[%c0_6, %c0_7], %7 {strides = array<i32>} : memref<2x512xf32, #tpu.memory_space<vmem>>, vector<2x512xf32>,
    %c1_i32 = arith.constant 1 : i32
    %9 = arith.cmpi eq, %arg1, %c1_i32 : i32
    %10 = arith.extui %9 : i1 to i32
    %c0_i32_8 = arith.constant 0 : i32
    %11 = arith.cmpi ne, %10, %c0_i32_8 : i32
    scf.if %11 {
      %c0_9 = arith.constant 0 : index
      %c0_10 = arith.constant 0 : index
      %12 = vector.load %arg6[%c0_9, %c0_10] : memref<2x512xf32, #tpu.memory_space<vmem>>, vector<2x512xf32>
      %c0_11 = arith.constant 0 : index
      %c0_12 = arith.constant 0 : index
      %13 = vector.load %arg4[%c0_11, %c0_12] : memref<1x512xf32, #tpu.memory_space<vmem>>, vector<1x512xf32>
      %14 = vector.broadcast %13 : vector<1x512xf32> to vector<2x512xf32>
      %15 = arith.addf %12, %14 : vector<2x512xf32>
      %c0_13 = arith.constant 0 : index
      %c0_14 = arith.constant 0 : index
      %16 = vector.load %arg5[%c0_13, %c0_14] : memref<2x512xf32, #tpu.memory_space<vmem>>, vector<2x512xf32>
      tpu.vector_store %arg5[%c0_13, %c0_14], %15 {strides = array<i32>} : memref<2x512xf32, #tpu.memory_space<vmem>>, vector<2x512xf32>,
    } else {
    }
    return
  }
  func.func @transform_0(%arg0: i32, %arg1: i32) -> (i32, i32) {
    %c0_i32 = arith.constant 0 : i32
    %c0_i32_0 = arith.constant 0 : i32
    return %c0_i32, %arg1 : i32, i32
  }
  func.func @transform_1(%arg0: i32, %arg1: i32) -> (i32, i32) {
    %c0_i32 = arith.constant 0 : i32
    return %arg1, %arg0 : i32, i32
  }
  func.func @transform_2(%arg0: i32, %arg1: i32) -> (i32, i32) {
    %c0_i32 = arith.constant 0 : i32
    %c0_i32_0 = arith.constant 0 : i32
    return %c0_i32, %arg0 : i32, i32
  }
  func.func @transform_3(%arg0: i32, %arg1: i32) -> (i32, i32) {
    %c0_i32 = arith.constant 0 : i32
    %c0_i32_0 = arith.constant 0 : i32
    return %c0_i32, %arg0 : i32, i32
  }
}

module attributes {stable_mosaic.version = 11 : i64} {
  func.func @kernel(%arg0: i32, %arg1: memref<2x1x38xf32, #tpu.memory_space<vmem>>, %arg2: memref<38x128xf32, #tpu.memory_space<vmem>>, %arg3: memref<1x128xf32, #tpu.memory_space<vmem>>, %arg4: memref<64x128xf32, #tpu.memory_space<vmem>>, %arg5: memref<1x128xf32, #tpu.memory_space<vmem>>, %arg6: memref<64x64xf32, #tpu.memory_space<vmem>>, %arg7: memref<1x64xf32, #tpu.memory_space<vmem>>, %arg8: memref<32x32xf32, #tpu.memory_space<vmem>>, %arg9: memref<1x32xf32, #tpu.memory_space<vmem>>, %arg10: memref<2x16x16xf32, #tpu.memory_space<vmem>>, %arg11: memref<2x2x64xf32, #tpu.memory_space<vmem>>, %arg12: memref<2x4x64xf32, #tpu.memory_space<vmem>>, %arg13: memref<2x8x32xf32, #tpu.memory_space<vmem>>) attributes {dimension_semantics = [#tpu.dimension_semantics<arbitrary>], iteration_bounds = array<i64: 1>, scalar_prefetch = 0 : i64, scratch_operands = 3 : i64, tpu.core_type = #tpu.core_type<tc>, window_params = [{pipeline_mode = #tpu.pipeline_mode<synchronous>, transform_indices = @transform_0, window_bounds = array<i64: 2, 1, 38>}, {pipeline_mode = #tpu.pipeline_mode<synchronous>, transform_indices = @transform_1, window_bounds = array<i64: 38, 128>}, {pipeline_mode = #tpu.pipeline_mode<synchronous>, transform_indices = @transform_2, window_bounds = array<i64: 1, 128>}, {pipeline_mode = #tpu.pipeline_mode<synchronous>, transform_indices = @transform_3, window_bounds = array<i64: 64, 128>}, {pipeline_mode = #tpu.pipeline_mode<synchronous>, transform_indices = @transform_4, window_bounds = array<i64: 1, 128>}, {pipeline_mode = #tpu.pipeline_mode<synchronous>, transform_indices = @transform_5, window_bounds = array<i64: 64, 64>}, {pipeline_mode = #tpu.pipeline_mode<synchronous>, transform_indices = @transform_6, window_bounds = array<i64: 1, 64>}, {pipeline_mode = #tpu.pipeline_mode<synchronous>, transform_indices = @transform_7, window_bounds = array<i64: 32, 32>}, {pipeline_mode = #tpu.pipeline_mode<synchronous>, transform_indices = @transform_8, window_bounds = array<i64: 1, 32>}, {pipeline_mode = #tpu.pipeline_mode<synchronous>, transform_indices = @transform_9, window_bounds = array<i64: 2, 16, 16>}]} {
    %c0 = arith.constant 0 : index
    %c0_0 = arith.constant 0 : index
    %c0_1 = arith.constant 0 : index
    %0 = vector.load %arg1[%c0, %c0_0, %c0_1] : memref<2x1x38xf32, #tpu.memory_space<vmem>>, vector<1x1x38xf32>
    %1 = vector.shape_cast %0 : vector<1x1x38xf32> to vector<1x38xf32>
    %c0_2 = arith.constant 0 : index
    %c0_3 = arith.constant 0 : index
    %2 = vector.load %arg2[%c0_2, %c0_3] : memref<38x128xf32, #tpu.memory_space<vmem>>, vector<38x128xf32>
    %c0_4 = arith.constant 0 : index
    %c0_5 = arith.constant 0 : index
    %3 = vector.load %arg3[%c0_4, %c0_5] : memref<1x128xf32, #tpu.memory_space<vmem>>, vector<1x128xf32>
    %cst = arith.constant dense<0.000000e+00> : vector<1x128xf32>
    %4 = tpu.matmul %1, %2, %cst {dimension_numbers = #tpu.dot_dimension_numbers<[1], [0], [0], [1], [0, 0, 1, 1], [], []>} : vector<1x38xf32>, vector<38x128xf32>, vector<1x128xf32> -> vector<1x128xf32>
    %5 = arith.addf %4, %3 : vector<1x128xf32>
    %cst_6 = arith.constant 0.000000e+00 : f32
    %6 = vector.broadcast %cst_6 : f32 to vector<1x128xf32>
    %7 = arith.maximumf %5, %6 : vector<1x128xf32>
    %8 = vector.extract_strided_slice %7 {offsets = [0, 0], sizes = [1, 64], strides = [1, 1]} : vector<1x128xf32> to vector<1x64xf32>
    %c0_7 = arith.constant 0 : index
    %c0_8 = arith.constant 0 : index
    %c0_9 = arith.constant 0 : index
    %9 = vector.load %arg11[%c0_7, %c0_8, %c0_9] : memref<2x2x64xf32, #tpu.memory_space<vmem>>, vector<1x1x64xf32>
    %10 = vector.shape_cast %9 : vector<1x1x64xf32> to vector<1x64xf32>
    %11 = vector.shape_cast %8 : vector<1x64xf32> to vector<1x1x64xf32>
    tpu.vector_store %arg11[%c0_7, %c0_8, %c0_9], %11 {strides = array<i32>} : memref<2x2x64xf32, #tpu.memory_space<vmem>>, vector<1x1x64xf32>,
    %12 = vector.extract_strided_slice %7 {offsets = [0, 64], sizes = [1, 64], strides = [1, 1]} : vector<1x128xf32> to vector<1x64xf32>
    %c0_10 = arith.constant 0 : index
    %c1 = arith.constant 1 : index
    %c0_11 = arith.constant 0 : index
    %13 = vector.load %arg11[%c0_10, %c1, %c0_11] : memref<2x2x64xf32, #tpu.memory_space<vmem>>, vector<1x1x64xf32>
    %14 = vector.shape_cast %13 : vector<1x1x64xf32> to vector<1x64xf32>
    %15 = vector.shape_cast %12 : vector<1x64xf32> to vector<1x1x64xf32>
    tpu.vector_store %arg11[%c0_10, %c1, %c0_11], %15 {strides = array<i32>} : memref<2x2x64xf32, #tpu.memory_space<vmem>>, vector<1x1x64xf32>,
    %c0_12 = arith.constant 0 : index
    %c0_13 = arith.constant 0 : index
    %c0_14 = arith.constant 0 : index
    %16 = vector.load %arg11[%c0_12, %c0_13, %c0_14] : memref<2x2x64xf32, #tpu.memory_space<vmem>>, vector<1x2x64xf32>
    %17 = vector.shape_cast %16 : vector<1x2x64xf32> to vector<2x64xf32>
    %c0_15 = arith.constant 0 : index
    %c0_16 = arith.constant 0 : index
    %18 = vector.load %arg4[%c0_15, %c0_16] : memref<64x128xf32, #tpu.memory_space<vmem>>, vector<64x128xf32>
    %c0_17 = arith.constant 0 : index
    %c0_18 = arith.constant 0 : index
    %19 = vector.load %arg5[%c0_17, %c0_18] : memref<1x128xf32, #tpu.memory_space<vmem>>, vector<1x128xf32>
    %cst_19 = arith.constant dense<0.000000e+00> : vector<2x128xf32>
    %20 = tpu.matmul %17, %18, %cst_19 {dimension_numbers = #tpu.dot_dimension_numbers<[1], [0], [0], [1], [0, 0, 1, 1], [], []>} : vector<2x64xf32>, vector<64x128xf32>, vector<2x128xf32> -> vector<2x128xf32>
    %21 = vector.broadcast %19 : vector<1x128xf32> to vector<2x128xf32>
    %22 = arith.addf %20, %21 : vector<2x128xf32>
    %cst_20 = arith.constant 0.000000e+00 : f32
    %23 = vector.broadcast %cst_20 : f32 to vector<2x128xf32>
    %24 = arith.maximumf %22, %23 : vector<2x128xf32>
    %25 = vector.extract_strided_slice %24 {offsets = [0, 0], sizes = [2, 64], strides = [1, 1]} : vector<2x128xf32> to vector<2x64xf32>
    %c0_21 = arith.constant 0 : index
    %c0_22 = arith.constant 0 : index
    %c0_23 = arith.constant 0 : index
    %26 = vector.load %arg12[%c0_21, %c0_22, %c0_23] : memref<2x4x64xf32, #tpu.memory_space<vmem>>, vector<1x2x64xf32>
    %27 = vector.shape_cast %26 : vector<1x2x64xf32> to vector<2x64xf32>
    %28 = vector.shape_cast %25 : vector<2x64xf32> to vector<1x2x64xf32>
    tpu.vector_store %arg12[%c0_21, %c0_22, %c0_23], %28 {strides = array<i32>} : memref<2x4x64xf32, #tpu.memory_space<vmem>>, vector<1x2x64xf32>,
    %29 = vector.extract_strided_slice %24 {offsets = [0, 64], sizes = [2, 64], strides = [1, 1]} : vector<2x128xf32> to vector<2x64xf32>
    %c0_24 = arith.constant 0 : index
    %c2 = arith.constant 2 : index
    %c0_25 = arith.constant 0 : index
    %30 = vector.load %arg12[%c0_24, %c2, %c0_25] : memref<2x4x64xf32, #tpu.memory_space<vmem>>, vector<1x2x64xf32>
    %31 = vector.shape_cast %30 : vector<1x2x64xf32> to vector<2x64xf32>
    %32 = vector.shape_cast %29 : vector<2x64xf32> to vector<1x2x64xf32>
    tpu.vector_store %arg12[%c0_24, %c2, %c0_25], %32 {strides = array<i32>} : memref<2x4x64xf32, #tpu.memory_space<vmem>>, vector<1x2x64xf32>,
    %c0_26 = arith.constant 0 : index
    %c0_27 = arith.constant 0 : index
    %c0_28 = arith.constant 0 : index
    %33 = vector.load %arg12[%c0_26, %c0_27, %c0_28] : memref<2x4x64xf32, #tpu.memory_space<vmem>>, vector<1x4x64xf32>
    %34 = vector.shape_cast %33 : vector<1x4x64xf32> to vector<4x64xf32>
    %c0_29 = arith.constant 0 : index
    %c0_30 = arith.constant 0 : index
    %35 = vector.load %arg6[%c0_29, %c0_30] : memref<64x64xf32, #tpu.memory_space<vmem>>, vector<64x64xf32>
    %c0_31 = arith.constant 0 : index
    %c0_32 = arith.constant 0 : index
    %36 = vector.load %arg7[%c0_31, %c0_32] : memref<1x64xf32, #tpu.memory_space<vmem>>, vector<1x64xf32>
    %cst_33 = arith.constant dense<0.000000e+00> : vector<4x64xf32>
    %37 = tpu.matmul %34, %35, %cst_33 {dimension_numbers = #tpu.dot_dimension_numbers<[1], [0], [0], [1], [0, 0, 1, 1], [], []>} : vector<4x64xf32>, vector<64x64xf32>, vector<4x64xf32> -> vector<4x64xf32>
    %38 = vector.broadcast %36 : vector<1x64xf32> to vector<4x64xf32>
    %39 = arith.addf %37, %38 : vector<4x64xf32>
    %cst_34 = arith.constant 0.000000e+00 : f32
    %40 = vector.broadcast %cst_34 : f32 to vector<4x64xf32>
    %41 = arith.maximumf %39, %40 : vector<4x64xf32>
    %42 = vector.extract_strided_slice %41 {offsets = [0, 0], sizes = [4, 32], strides = [1, 1]} : vector<4x64xf32> to vector<4x32xf32>
    %c0_35 = arith.constant 0 : index
    %c0_36 = arith.constant 0 : index
    %c0_37 = arith.constant 0 : index
    %43 = vector.load %arg13[%c0_35, %c0_36, %c0_37] : memref<2x8x32xf32, #tpu.memory_space<vmem>>, vector<1x4x32xf32>
    %44 = vector.shape_cast %43 : vector<1x4x32xf32> to vector<4x32xf32>
    %45 = vector.shape_cast %42 : vector<4x32xf32> to vector<1x4x32xf32>
    tpu.vector_store %arg13[%c0_35, %c0_36, %c0_37], %45 {strides = array<i32>} : memref<2x8x32xf32, #tpu.memory_space<vmem>>, vector<1x4x32xf32>,
    %46 = vector.extract_strided_slice %41 {offsets = [0, 32], sizes = [4, 32], strides = [1, 1]} : vector<4x64xf32> to vector<4x32xf32>
    %c0_38 = arith.constant 0 : index
    %c4 = arith.constant 4 : index
    %c0_39 = arith.constant 0 : index
    %47 = vector.load %arg13[%c0_38, %c4, %c0_39] : memref<2x8x32xf32, #tpu.memory_space<vmem>>, vector<1x4x32xf32>
    %48 = vector.shape_cast %47 : vector<1x4x32xf32> to vector<4x32xf32>
    %49 = vector.shape_cast %46 : vector<4x32xf32> to vector<1x4x32xf32>
    tpu.vector_store %arg13[%c0_38, %c4, %c0_39], %49 {strides = array<i32>} : memref<2x8x32xf32, #tpu.memory_space<vmem>>, vector<1x4x32xf32>,
    %c0_40 = arith.constant 0 : index
    %c0_41 = arith.constant 0 : index
    %c0_42 = arith.constant 0 : index
    %50 = vector.load %arg13[%c0_40, %c0_41, %c0_42] : memref<2x8x32xf32, #tpu.memory_space<vmem>>, vector<1x8x32xf32>
    %51 = vector.shape_cast %50 : vector<1x8x32xf32> to vector<8x32xf32>
    %c0_43 = arith.constant 0 : index
    %c0_44 = arith.constant 0 : index
    %52 = vector.load %arg8[%c0_43, %c0_44] : memref<32x32xf32, #tpu.memory_space<vmem>>, vector<32x32xf32>
    %c0_45 = arith.constant 0 : index
    %c0_46 = arith.constant 0 : index
    %53 = vector.load %arg9[%c0_45, %c0_46] : memref<1x32xf32, #tpu.memory_space<vmem>>, vector<1x32xf32>
    %cst_47 = arith.constant dense<0.000000e+00> : vector<8x32xf32>
    %54 = tpu.matmul %51, %52, %cst_47 {dimension_numbers = #tpu.dot_dimension_numbers<[1], [0], [0], [1], [0, 0, 1, 1], [], []>} : vector<8x32xf32>, vector<32x32xf32>, vector<8x32xf32> -> vector<8x32xf32>
    %55 = vector.broadcast %53 : vector<1x32xf32> to vector<8x32xf32>
    %56 = arith.addf %54, %55 : vector<8x32xf32>
    %cst_48 = arith.constant 0.000000e+00 : f32
    %57 = vector.broadcast %cst_48 : f32 to vector<8x32xf32>
    %58 = arith.maximumf %56, %57 : vector<8x32xf32>
    %59 = vector.extract_strided_slice %58 {offsets = [0, 0], sizes = [8, 16], strides = [1, 1]} : vector<8x32xf32> to vector<8x16xf32>
    %c0_49 = arith.constant 0 : index
    %c0_50 = arith.constant 0 : index
    %c0_51 = arith.constant 0 : index
    %60 = vector.load %arg10[%c0_49, %c0_50, %c0_51] : memref<2x16x16xf32, #tpu.memory_space<vmem>>, vector<1x8x16xf32>
    %61 = vector.shape_cast %60 : vector<1x8x16xf32> to vector<8x16xf32>
    %62 = vector.shape_cast %59 : vector<8x16xf32> to vector<1x8x16xf32>
    tpu.vector_store %arg10[%c0_49, %c0_50, %c0_51], %62 {strides = array<i32>} : memref<2x16x16xf32, #tpu.memory_space<vmem>>, vector<1x8x16xf32>,
    %63 = vector.extract_strided_slice %58 {offsets = [0, 16], sizes = [8, 16], strides = [1, 1]} : vector<8x32xf32> to vector<8x16xf32>
    %c0_52 = arith.constant 0 : index
    %c8 = arith.constant 8 : index
    %c0_53 = arith.constant 0 : index
    %64 = vector.load %arg10[%c0_52, %c8, %c0_53] : memref<2x16x16xf32, #tpu.memory_space<vmem>>, vector<1x8x16xf32>
    %65 = vector.shape_cast %64 : vector<1x8x16xf32> to vector<8x16xf32>
    %66 = vector.shape_cast %63 : vector<8x16xf32> to vector<1x8x16xf32>
    tpu.vector_store %arg10[%c0_52, %c8, %c0_53], %66 {strides = array<i32>} : memref<2x16x16xf32, #tpu.memory_space<vmem>>, vector<1x8x16xf32>,
    %c1_54 = arith.constant 1 : index
    %c0_55 = arith.constant 0 : index
    %c0_56 = arith.constant 0 : index
    %67 = vector.load %arg1[%c1_54, %c0_55, %c0_56] : memref<2x1x38xf32, #tpu.memory_space<vmem>>, vector<1x1x38xf32>
    %68 = vector.shape_cast %67 : vector<1x1x38xf32> to vector<1x38xf32>
    %c0_57 = arith.constant 0 : index
    %c0_58 = arith.constant 0 : index
    %69 = vector.load %arg2[%c0_57, %c0_58] : memref<38x128xf32, #tpu.memory_space<vmem>>, vector<38x128xf32>
    %c0_59 = arith.constant 0 : index
    %c0_60 = arith.constant 0 : index
    %70 = vector.load %arg3[%c0_59, %c0_60] : memref<1x128xf32, #tpu.memory_space<vmem>>, vector<1x128xf32>
    %cst_61 = arith.constant dense<0.000000e+00> : vector<1x128xf32>
    %71 = tpu.matmul %68, %69, %cst_61 {dimension_numbers = #tpu.dot_dimension_numbers<[1], [0], [0], [1], [0, 0, 1, 1], [], []>} : vector<1x38xf32>, vector<38x128xf32>, vector<1x128xf32> -> vector<1x128xf32>
    %72 = arith.addf %71, %70 : vector<1x128xf32>
    %cst_62 = arith.constant 0.000000e+00 : f32
    %73 = vector.broadcast %cst_62 : f32 to vector<1x128xf32>
    %74 = arith.maximumf %72, %73 : vector<1x128xf32>
    %75 = vector.extract_strided_slice %74 {offsets = [0, 0], sizes = [1, 64], strides = [1, 1]} : vector<1x128xf32> to vector<1x64xf32>
    %c1_63 = arith.constant 1 : index
    %c0_64 = arith.constant 0 : index
    %c0_65 = arith.constant 0 : index
    %76 = vector.load %arg11[%c1_63, %c0_64, %c0_65] : memref<2x2x64xf32, #tpu.memory_space<vmem>>, vector<1x1x64xf32>
    %77 = vector.shape_cast %76 : vector<1x1x64xf32> to vector<1x64xf32>
    %78 = vector.shape_cast %75 : vector<1x64xf32> to vector<1x1x64xf32>
    tpu.vector_store %arg11[%c1_63, %c0_64, %c0_65], %78 {strides = array<i32>} : memref<2x2x64xf32, #tpu.memory_space<vmem>>, vector<1x1x64xf32>,
    %79 = vector.extract_strided_slice %74 {offsets = [0, 64], sizes = [1, 64], strides = [1, 1]} : vector<1x128xf32> to vector<1x64xf32>
    %c1_66 = arith.constant 1 : index
    %c1_67 = arith.constant 1 : index
    %c0_68 = arith.constant 0 : index
    %80 = vector.load %arg11[%c1_66, %c1_67, %c0_68] : memref<2x2x64xf32, #tpu.memory_space<vmem>>, vector<1x1x64xf32>
    %81 = vector.shape_cast %80 : vector<1x1x64xf32> to vector<1x64xf32>
    %82 = vector.shape_cast %79 : vector<1x64xf32> to vector<1x1x64xf32>
    tpu.vector_store %arg11[%c1_66, %c1_67, %c0_68], %82 {strides = array<i32>} : memref<2x2x64xf32, #tpu.memory_space<vmem>>, vector<1x1x64xf32>,
    %c1_69 = arith.constant 1 : index
    %c0_70 = arith.constant 0 : index
    %c0_71 = arith.constant 0 : index
    %83 = vector.load %arg11[%c1_69, %c0_70, %c0_71] : memref<2x2x64xf32, #tpu.memory_space<vmem>>, vector<1x2x64xf32>
    %84 = vector.shape_cast %83 : vector<1x2x64xf32> to vector<2x64xf32>
    %c0_72 = arith.constant 0 : index
    %c0_73 = arith.constant 0 : index
    %85 = vector.load %arg4[%c0_72, %c0_73] : memref<64x128xf32, #tpu.memory_space<vmem>>, vector<64x128xf32>
    %c0_74 = arith.constant 0 : index
    %c0_75 = arith.constant 0 : index
    %86 = vector.load %arg5[%c0_74, %c0_75] : memref<1x128xf32, #tpu.memory_space<vmem>>, vector<1x128xf32>
    %cst_76 = arith.constant dense<0.000000e+00> : vector<2x128xf32>
    %87 = tpu.matmul %84, %85, %cst_76 {dimension_numbers = #tpu.dot_dimension_numbers<[1], [0], [0], [1], [0, 0, 1, 1], [], []>} : vector<2x64xf32>, vector<64x128xf32>, vector<2x128xf32> -> vector<2x128xf32>
    %88 = vector.broadcast %86 : vector<1x128xf32> to vector<2x128xf32>
    %89 = arith.addf %87, %88 : vector<2x128xf32>
    %cst_77 = arith.constant 0.000000e+00 : f32
    %90 = vector.broadcast %cst_77 : f32 to vector<2x128xf32>
    %91 = arith.maximumf %89, %90 : vector<2x128xf32>
    %92 = vector.extract_strided_slice %91 {offsets = [0, 0], sizes = [2, 64], strides = [1, 1]} : vector<2x128xf32> to vector<2x64xf32>
    %c1_78 = arith.constant 1 : index
    %c0_79 = arith.constant 0 : index
    %c0_80 = arith.constant 0 : index
    %93 = vector.load %arg12[%c1_78, %c0_79, %c0_80] : memref<2x4x64xf32, #tpu.memory_space<vmem>>, vector<1x2x64xf32>
    %94 = vector.shape_cast %93 : vector<1x2x64xf32> to vector<2x64xf32>
    %95 = vector.shape_cast %92 : vector<2x64xf32> to vector<1x2x64xf32>
    tpu.vector_store %arg12[%c1_78, %c0_79, %c0_80], %95 {strides = array<i32>} : memref<2x4x64xf32, #tpu.memory_space<vmem>>, vector<1x2x64xf32>,
    %96 = vector.extract_strided_slice %91 {offsets = [0, 64], sizes = [2, 64], strides = [1, 1]} : vector<2x128xf32> to vector<2x64xf32>
    %c1_81 = arith.constant 1 : index
    %c2_82 = arith.constant 2 : index
    %c0_83 = arith.constant 0 : index
    %97 = vector.load %arg12[%c1_81, %c2_82, %c0_83] : memref<2x4x64xf32, #tpu.memory_space<vmem>>, vector<1x2x64xf32>
    %98 = vector.shape_cast %97 : vector<1x2x64xf32> to vector<2x64xf32>
    %99 = vector.shape_cast %96 : vector<2x64xf32> to vector<1x2x64xf32>
    tpu.vector_store %arg12[%c1_81, %c2_82, %c0_83], %99 {strides = array<i32>} : memref<2x4x64xf32, #tpu.memory_space<vmem>>, vector<1x2x64xf32>,
    %c1_84 = arith.constant 1 : index
    %c0_85 = arith.constant 0 : index
    %c0_86 = arith.constant 0 : index
    %100 = vector.load %arg12[%c1_84, %c0_85, %c0_86] : memref<2x4x64xf32, #tpu.memory_space<vmem>>, vector<1x4x64xf32>
    %101 = vector.shape_cast %100 : vector<1x4x64xf32> to vector<4x64xf32>
    %c0_87 = arith.constant 0 : index
    %c0_88 = arith.constant 0 : index
    %102 = vector.load %arg6[%c0_87, %c0_88] : memref<64x64xf32, #tpu.memory_space<vmem>>, vector<64x64xf32>
    %c0_89 = arith.constant 0 : index
    %c0_90 = arith.constant 0 : index
    %103 = vector.load %arg7[%c0_89, %c0_90] : memref<1x64xf32, #tpu.memory_space<vmem>>, vector<1x64xf32>
    %cst_91 = arith.constant dense<0.000000e+00> : vector<4x64xf32>
    %104 = tpu.matmul %101, %102, %cst_91 {dimension_numbers = #tpu.dot_dimension_numbers<[1], [0], [0], [1], [0, 0, 1, 1], [], []>} : vector<4x64xf32>, vector<64x64xf32>, vector<4x64xf32> -> vector<4x64xf32>
    %105 = vector.broadcast %103 : vector<1x64xf32> to vector<4x64xf32>
    %106 = arith.addf %104, %105 : vector<4x64xf32>
    %cst_92 = arith.constant 0.000000e+00 : f32
    %107 = vector.broadcast %cst_92 : f32 to vector<4x64xf32>
    %108 = arith.maximumf %106, %107 : vector<4x64xf32>
    %109 = vector.extract_strided_slice %108 {offsets = [0, 0], sizes = [4, 32], strides = [1, 1]} : vector<4x64xf32> to vector<4x32xf32>
    %c1_93 = arith.constant 1 : index
    %c0_94 = arith.constant 0 : index
    %c0_95 = arith.constant 0 : index
    %110 = vector.load %arg13[%c1_93, %c0_94, %c0_95] : memref<2x8x32xf32, #tpu.memory_space<vmem>>, vector<1x4x32xf32>
    %111 = vector.shape_cast %110 : vector<1x4x32xf32> to vector<4x32xf32>
    %112 = vector.shape_cast %109 : vector<4x32xf32> to vector<1x4x32xf32>
    tpu.vector_store %arg13[%c1_93, %c0_94, %c0_95], %112 {strides = array<i32>} : memref<2x8x32xf32, #tpu.memory_space<vmem>>, vector<1x4x32xf32>,
    %113 = vector.extract_strided_slice %108 {offsets = [0, 32], sizes = [4, 32], strides = [1, 1]} : vector<4x64xf32> to vector<4x32xf32>
    %c1_96 = arith.constant 1 : index
    %c4_97 = arith.constant 4 : index
    %c0_98 = arith.constant 0 : index
    %114 = vector.load %arg13[%c1_96, %c4_97, %c0_98] : memref<2x8x32xf32, #tpu.memory_space<vmem>>, vector<1x4x32xf32>
    %115 = vector.shape_cast %114 : vector<1x4x32xf32> to vector<4x32xf32>
    %116 = vector.shape_cast %113 : vector<4x32xf32> to vector<1x4x32xf32>
    tpu.vector_store %arg13[%c1_96, %c4_97, %c0_98], %116 {strides = array<i32>} : memref<2x8x32xf32, #tpu.memory_space<vmem>>, vector<1x4x32xf32>,
    %c1_99 = arith.constant 1 : index
    %c0_100 = arith.constant 0 : index
    %c0_101 = arith.constant 0 : index
    %117 = vector.load %arg13[%c1_99, %c0_100, %c0_101] : memref<2x8x32xf32, #tpu.memory_space<vmem>>, vector<1x8x32xf32>
    %118 = vector.shape_cast %117 : vector<1x8x32xf32> to vector<8x32xf32>
    %c0_102 = arith.constant 0 : index
    %c0_103 = arith.constant 0 : index
    %119 = vector.load %arg8[%c0_102, %c0_103] : memref<32x32xf32, #tpu.memory_space<vmem>>, vector<32x32xf32>
    %c0_104 = arith.constant 0 : index
    %c0_105 = arith.constant 0 : index
    %120 = vector.load %arg9[%c0_104, %c0_105] : memref<1x32xf32, #tpu.memory_space<vmem>>, vector<1x32xf32>
    %cst_106 = arith.constant dense<0.000000e+00> : vector<8x32xf32>
    %121 = tpu.matmul %118, %119, %cst_106 {dimension_numbers = #tpu.dot_dimension_numbers<[1], [0], [0], [1], [0, 0, 1, 1], [], []>} : vector<8x32xf32>, vector<32x32xf32>, vector<8x32xf32> -> vector<8x32xf32>
    %122 = vector.broadcast %120 : vector<1x32xf32> to vector<8x32xf32>
    %123 = arith.addf %121, %122 : vector<8x32xf32>
    %cst_107 = arith.constant 0.000000e+00 : f32
    %124 = vector.broadcast %cst_107 : f32 to vector<8x32xf32>
    %125 = arith.maximumf %123, %124 : vector<8x32xf32>
    %126 = vector.extract_strided_slice %125 {offsets = [0, 0], sizes = [8, 16], strides = [1, 1]} : vector<8x32xf32> to vector<8x16xf32>
    %c1_108 = arith.constant 1 : index
    %c0_109 = arith.constant 0 : index
    %c0_110 = arith.constant 0 : index
    %127 = vector.load %arg10[%c1_108, %c0_109, %c0_110] : memref<2x16x16xf32, #tpu.memory_space<vmem>>, vector<1x8x16xf32>
    %128 = vector.shape_cast %127 : vector<1x8x16xf32> to vector<8x16xf32>
    %129 = vector.shape_cast %126 : vector<8x16xf32> to vector<1x8x16xf32>
    tpu.vector_store %arg10[%c1_108, %c0_109, %c0_110], %129 {strides = array<i32>} : memref<2x16x16xf32, #tpu.memory_space<vmem>>, vector<1x8x16xf32>,
    %130 = vector.extract_strided_slice %125 {offsets = [0, 16], sizes = [8, 16], strides = [1, 1]} : vector<8x32xf32> to vector<8x16xf32>
    %c1_111 = arith.constant 1 : index
    %c8_112 = arith.constant 8 : index
    %c0_113 = arith.constant 0 : index
    %131 = vector.load %arg10[%c1_111, %c8_112, %c0_113] : memref<2x16x16xf32, #tpu.memory_space<vmem>>, vector<1x8x16xf32>
    %132 = vector.shape_cast %131 : vector<1x8x16xf32> to vector<8x16xf32>
    %133 = vector.shape_cast %130 : vector<8x16xf32> to vector<1x8x16xf32>
    tpu.vector_store %arg10[%c1_111, %c8_112, %c0_113], %133 {strides = array<i32>} : memref<2x16x16xf32, #tpu.memory_space<vmem>>, vector<1x8x16xf32>,
    return
  }
  func.func @transform_0(%arg0: i32) -> (i32, i32, i32) {
    %c0_i32 = arith.constant 0 : i32
    %c0_i32_0 = arith.constant 0 : i32
    %c0_i32_1 = arith.constant 0 : i32
    %c0_i32_2 = arith.constant 0 : i32
    return %c0_i32, %c0_i32_0, %c0_i32_1 : i32, i32, i32
  }
  func.func @transform_1(%arg0: i32) -> (i32, i32) {
    %c0_i32 = arith.constant 0 : i32
    %c0_i32_0 = arith.constant 0 : i32
    %c0_i32_1 = arith.constant 0 : i32
    return %c0_i32, %c0_i32_0 : i32, i32
  }
  func.func @transform_2(%arg0: i32) -> (i32, i32) {
    %c0_i32 = arith.constant 0 : i32
    %c0_i32_0 = arith.constant 0 : i32
    %c0_i32_1 = arith.constant 0 : i32
    return %c0_i32, %c0_i32_0 : i32, i32
  }
  func.func @transform_3(%arg0: i32) -> (i32, i32) {
    %c0_i32 = arith.constant 0 : i32
    %c0_i32_0 = arith.constant 0 : i32
    %c0_i32_1 = arith.constant 0 : i32
    return %c0_i32, %c0_i32_0 : i32, i32
  }
  func.func @transform_4(%arg0: i32) -> (i32, i32) {
    %c0_i32 = arith.constant 0 : i32
    %c0_i32_0 = arith.constant 0 : i32
    %c0_i32_1 = arith.constant 0 : i32
    return %c0_i32, %c0_i32_0 : i32, i32
  }
  func.func @transform_5(%arg0: i32) -> (i32, i32) {
    %c0_i32 = arith.constant 0 : i32
    %c0_i32_0 = arith.constant 0 : i32
    %c0_i32_1 = arith.constant 0 : i32
    return %c0_i32, %c0_i32_0 : i32, i32
  }
  func.func @transform_6(%arg0: i32) -> (i32, i32) {
    %c0_i32 = arith.constant 0 : i32
    %c0_i32_0 = arith.constant 0 : i32
    %c0_i32_1 = arith.constant 0 : i32
    return %c0_i32, %c0_i32_0 : i32, i32
  }
  func.func @transform_7(%arg0: i32) -> (i32, i32) {
    %c0_i32 = arith.constant 0 : i32
    %c0_i32_0 = arith.constant 0 : i32
    %c0_i32_1 = arith.constant 0 : i32
    return %c0_i32, %c0_i32_0 : i32, i32
  }
  func.func @transform_8(%arg0: i32) -> (i32, i32) {
    %c0_i32 = arith.constant 0 : i32
    %c0_i32_0 = arith.constant 0 : i32
    %c0_i32_1 = arith.constant 0 : i32
    return %c0_i32, %c0_i32_0 : i32, i32
  }
  func.func @transform_9(%arg0: i32) -> (i32, i32, i32) {
    %c0_i32 = arith.constant 0 : i32
    %c0_i32_0 = arith.constant 0 : i32
    %c0_i32_1 = arith.constant 0 : i32
    %c0_i32_2 = arith.constant 0 : i32
    return %c0_i32, %c0_i32_0, %c0_i32_1 : i32, i32, i32
  }
}

</mosaic_0001>

<llo_original>
// kernel: _lambda_.3
$region0: #{_lambda_.3}
  #allocation0 [shape = 'u32[]', space=smem, size = 0x4, offset = 0x4, fixed_abs, tag = 'smem constant byte address 0x4 - core index']
  #allocation1 [shape = 'u32[72,128]{1,0:T(1,128)}', space=vmem, size = 0x9000, scoped, tag = 'internal scratch']
  #allocation2 [shape = 'f32[2,512]{1,0:T(2,128)}', space=vmem, size = 0x1000, scoped, tag = 'scratch operand']
  %s0 = inlined_call_operand.vmem [shape: f32[2,256], index: 0, kind: input, shape index: {}]
  %s1 = inlined_call_operand.hbm [shape: f32[256,2560], index: 1, kind: input, shape index: {}]
  %s2 = inlined_call_operand.hbm [shape: f32[1,2560], index: 2, kind: input, shape index: {}]
  %s3 = inlined_call_operand.hbm [shape: f32[2,2560], index: 3, kind: output, shape index: {}]
  %s4 = sld [smem:[#allocation0]]
  $region61: #{_lambda_.3} parent=0
    _
  %s6 = ssub.s32 1, %s4
  %s7 = scalar_select 0, %s6, %s4
  $region1: #{_lambda_.3} parent=0
    #allocation3 [shape = 'u8[524288]{0}', space=vmem, size = 0x80000, scoped, tag = 'input window, operand 1']
    #allocation4 [shape = 's32[2]{0}', space=sflag, size = 0x8, scoped, tag = 'scoped memory for _lambda_.3']
    #allocation5 [shape = 's32[2]{0}', space=sflag, size = 0x8, scoped, tag = 'scoped memory for _lambda_.3']
    #allocation6 [shape = 'u8[4096]{0}', space=vmem, size = 0x1000, scoped, tag = 'input window, operand 2']
    #allocation7 [shape = 's32[2]{0}', space=sflag, size = 0x8, scoped, tag = 'scoped memory for _lambda_.3']
    #allocation8 [shape = 'u8[8192]{0}', space=vmem, size = 0x2000, scoped, tag = 'output window, operand 0']
    %8 = vsyncpa [#allocation4], 0
    %s9 = scalar_lea.sflag [#allocation4], 1
    %10 = vsyncpa %s9, 0
    %11 = vsyncpa [#allocation7], 0
    %s12 = scalar_lea.sflag [#allocation7], 1
    %13 = vsyncpa %s12, 0
    %14 = vsyncpa [#allocation5], 0
    %s15 = scalar_lea.sflag [#allocation5], 1
    %16 = vsyncpa %s15, 0
    loop: start=0, step=1, limit=12
    $region2: #{_lambda_.3} parent=1 // loop_pre_header
      _
    $region3: #{_lambda_.3} parent=1 // loop_header
      %s18 = sphi 0, %s22
      %p19 = scmp.ge.s32.totalorder %s18, 12
      %s25 = sphi 0, %s37
      %s26 = sphi 0, %s33
      %s27 = sphi 0, %s25
      %s28 = sphi 0, %s26
      %s29 = sphi 0, %s27
      %s30 = sphi 0, %s28
      %s40 = sphi 0, %s42
      %s43 = sphi 0, %s40
      %s44 = sphi 0, %s43
      %s60 = sphi 0, %s44
      %s68 = sphi 0, %s70
      %s71 = sphi 0, %s68
      %s72 = sphi 0, %s71
      %s88 = sphi 0, %s72
      %s94 = sphi 0, %s96
      %s97 = sphi 0, %s94
      %s98 = sphi 0, %s97
      %s114 = sphi 0, %s98
      %s120 = sphi 0, %s122
      %s123 = sphi 0, %s120
      %s124 = sphi 0, %s123
      %s140 = sphi 0, %s124
    $region4: #{_lambda_.3} parent=1 // loop_header_branch
      %21 = sbr.rel (%p19) target = $region8
    $region5: #{_lambda_.3} parent=1 // loop_body
      %s23 = ssub.s32 %s18, 1
      %s24 = ssub.s32 %s18, 2
      %s31 = sadd.s32 1, %s26
      %p32 = scmp.ge.s32.totalorder %s31, 2
      %s33 = scalar_select %p32, 0, %s31
      %s34 = sadd.s32 1, %s25
      %s35 = scalar_select %p32, %s34, %s25
      %p36 = scmp.ge.s32.totalorder %s35, 5
      %s37 = scalar_select %p36, 0, %s35
      %s38 = ssub.s32 %s26, %s33
      %p39 = scmp.eq.s32.totalorder %s38, 0
      %s41 = sadd.s32 %s40, 1
      %s42 = scalar_select %p39, %s40, %s41
      %p45 = pneg %p39
      %p46 = scmp.eq.s32.totalorder %s18, 9
      %p47 = por %p45, %p46
      %p48 = scmp.ne.s32.totalorder %s40, %s43
      %p49 = scmp.eq.s32.totalorder %s18, 0
      %p50 = por %p48, %p49
      %p51 = scmp.ne.s32.totalorder %s40, %s43
      %p52 = scmp.eq.s32.totalorder %s23, 9
      %p53 = por %p51, %p52
      %p54 = scmp.ne.s32.totalorder %s43, %s44
      %p55 = scmp.eq.s32.totalorder %s23, 0
      %p56 = por %p54, %p55
      %p57 = scmp.ne.s32.totalorder %s43, %s44
      %p58 = scmp.eq.s32.totalorder %s24, 9
      %p59 = por %p57, %p58
      %p61 = scmp.ne.s32.totalorder %s44, %s60
      %p62 = scmp.eq.s32.totalorder %s24, 0
      %p63 = por %p61, %p62
      %s64 = ssub.s32 %s26, %s33
      %s65 = ssub.s32 %s25, %s37
      %s66 = sor.u32 %s64, %s65
      %p67 = scmp.eq.s32.totalorder %s66, 0
      %s69 = sadd.s32 %s68, 1
      %s70 = scalar_select %p67, %s68, %s69
      %p73 = pneg %p67
      %p74 = scmp.eq.s32.totalorder %s18, 9
      %p75 = por %p73, %p74
      %p76 = scmp.ne.s32.totalorder %s68, %s71
      %p77 = scmp.eq.s32.totalorder %s18, 0
      %p78 = por %p76, %p77
      %p79 = scmp.ne.s32.totalorder %s68, %s71
      %p80 = scmp.eq.s32.totalorder %s23, 9
      %p81 = por %p79, %p80
      %p82 = scmp.ne.s32.totalorder %s71, %s72
      %p83 = scmp.eq.s32.totalorder %s23, 0
      %p84 = por %p82, %p83
      %p85 = scmp.ne.s32.totalorder %s71, %s72
      %p86 = scmp.eq.s32.totalorder %s24, 9
      %p87 = por %p85, %p86
      %p89 = scmp.ne.s32.totalorder %s72, %s88
      %p90 = scmp.eq.s32.totalorder %s24, 0
      %p91 = por %p89, %p90
      %s92 = ssub.s32 %s25, %s37
      %p93 = scmp.eq.s32.totalorder %s92, 0
      %s95 = sadd.s32 %s94, 1
      %s96 = scalar_select %p93, %s94, %s95
      %p99 = pneg %p93
      %p100 = scmp.eq.s32.totalorder %s18, 9
      %p101 = por %p99, %p100
      %p102 = scmp.ne.s32.totalorder %s94, %s97
      %p103 = scmp.eq.s32.totalorder %s18, 0
      %p104 = por %p102, %p103
      %p105 = scmp.ne.s32.totalorder %s94, %s97
      %p106 = scmp.eq.s32.totalorder %s23, 9
      %p107 = por %p105, %p106
      %p108 = scmp.ne.s32.totalorder %s97, %s98
      %p109 = scmp.eq.s32.totalorder %s23, 0
      %p110 = por %p108, %p109
      %p111 = scmp.ne.s32.totalorder %s97, %s98
      %p112 = scmp.eq.s32.totalorder %s24, 9
      %p113 = por %p111, %p112
      %p115 = scmp.ne.s32.totalorder %s98, %s114
      %p116 = scmp.eq.s32.totalorder %s24, 0
      %p117 = por %p115, %p116
      %s118 = ssub.s32 %s25, %s37
      %p119 = scmp.eq.s32.totalorder %s118, 0
      %s121 = sadd.s32 %s120, 1
      %s122 = scalar_select %p119, %s120, %s121
      %p125 = pneg %p119
      %p126 = scmp.eq.s32.totalorder %s18, 9
      %p127 = por %p125, %p126
      %p128 = scmp.ne.s32.totalorder %s120, %s123
      %p129 = scmp.eq.s32.totalorder %s18, 0
      %p130 = por %p128, %p129
      %p131 = scmp.ne.s32.totalorder %s120, %s123
      %p132 = scmp.eq.s32.totalorder %s23, 9
      %p133 = por %p131, %p132
      %p134 = scmp.ne.s32.totalorder %s123, %s124
      %p135 = scmp.eq.s32.totalorder %s23, 0
      %p136 = por %p134, %p135
      %p137 = scmp.ne.s32.totalorder %s123, %s124
      %p138 = scmp.eq.s32.totalorder %s24, 9
      %p139 = por %p137, %p138
      %p141 = scmp.ne.s32.totalorder %s124, %s140
      %p142 = scmp.eq.s32.totalorder %s24, 0
      %p143 = por %p141, %p142
      %p144 = scmp.le.s32.totalorder 1, %s18
      %p145 = scmp.lt.s32.totalorder %s18, 11
      %p146 = pnand %p144, %p145
      %p147 = pneg %p146
      // Predicated region
      $region9: #{_lambda_.3} parent=5 // pred_check
        _
      $region10: #{_lambda_.3} parent=5 // pred_check_branch
        %149 = sbr.rel (%p146) target = $region12
      $region11: #{_lambda_.3} parent=5 // pred_region
        %s150 = ssub.s32 %s18, 1
      $region12: #{_lambda_.3} parent=5 // pred_fallthru
        _
      %p151 = scmp.lt.s32.totalorder %s18, 10
      // Predicated region
      $region13: #{_lambda_.3} parent=5 // pred_check
        %p152 = pneg %p151
      $region14: #{_lambda_.3} parent=5 // pred_check_branch
        %154 = sbr.rel (%p152) target = $region16
      $region15: #{_lambda_.3} parent=5 // pred_region
        // Predicated region
        $region17: #{_lambda_.3} parent=15 // pred_check
          %p155 = pneg %p50
        $region18: #{_lambda_.3} parent=15 // pred_check_branch
          %157 = sbr.rel (%p155) target = $region20
        $region19: #{_lambda_.3} parent=15 // pred_region
          %p158 = scmp.lt.s32.totalorder %s26, 1
          %s159 = scalar_select %p158, %s26, 1
          %s160 = smul.addr %s159, 2
          %s161 = scalar_lea.vmem %s0, %s160
        $region20: #{_lambda_.3} parent=15 // pred_fallthru
          _
        // Predicated region
        $region21: #{_lambda_.3} parent=15 // pred_check
          %p162 = pneg %p78
        $region22: #{_lambda_.3} parent=15 // pred_check_branch
          %164 = sbr.rel (%p162) target = $region24
        $region23: #{_lambda_.3} parent=15 // pred_region
          %s165 = sand.u32 %s68, 1
          %s166 = scalar_lea.sflag [#allocation4], %s165
          %s167 = sand.u32 %s68, 1
          %s168 = smul.addr %s167, 512
          %s169 = scalar_lea.vmem [#allocation3], %s168
          %s170 = smul.u32 16, %s26
          %s171 = smul.u32 4, %s25
          %173 = vsyncadd %s166, 0
          %s174 = smul.addr %s170, 20
          %s175 = sadd.s32 %s171, %s174
          %s176 = smul.addr %s175, 8
          %s177 = scalar_lea.hbm %s1, %s176
          %s178 = sshll.u32 %s177, 4
          %s179 = int_to_ptr.hbm [resolvable:$true] %s178
          %s180 = sshll.u32 %s169, 4
          %s181 = int_to_ptr.vmem [resolvable:$true] %s180
          %186 = dma.hbm_to_vmem [thread:$0]  %s179, 8192, %s181, %s166, 2560, 512, 32
        $region24: #{_lambda_.3} parent=15 // pred_fallthru
          _
        // Predicated region
        $region25: #{_lambda_.3} parent=15 // pred_check
          %p187 = pneg %p104
        $region26: #{_lambda_.3} parent=15 // pred_check_branch
          %189 = sbr.rel (%p187) target = $region28
        $region27: #{_lambda_.3} parent=15 // pred_region
          %s190 = sand.u32 %s94, 1
          %s191 = scalar_lea.sflag [#allocation7], %s190
          %s192 = sand.u32 %s94, 1
          %s193 = smul.addr %s192, 4
          %s194 = scalar_lea.vmem [#allocation6], %s193
          %s195 = smul.u32 4, %s25
          %197 = vsyncadd %s191, 0
          %s198 = scalar_lea.hbm %s2, %s195
          %s200 = sshll.u32 %s198, 4
          %s201 = int_to_ptr.hbm [resolvable:$true] %s200
          %s202 = sshll.u32 %s194, 4
          %s203 = int_to_ptr.vmem [resolvable:$true] %s202
          %205 = dma.hbm_to_vmem [thread:$0]  %s201, 64, %s203, %s191
        $region28: #{_lambda_.3} parent=15 // pred_fallthru
          _
      $region16: #{_lambda_.3} parent=5 // pred_fallthru
        _
      %p206 = scmp.le.s32.totalorder 1, %s18
      %p207 = scmp.lt.s32.totalorder %s18, 11
      %p208 = pnand %p206, %p207
      %p209 = pneg %p208
      // Predicated region
      $region29: #{_lambda_.3} parent=5 // pred_check
        _
      $region30: #{_lambda_.3} parent=5 // pred_check_branch
        %211 = sbr.rel (%p208) target = $region32
      $region31: #{_lambda_.3} parent=5 // pred_region
        %s212 = ssub.s32 %s18, 1
        %s213 = sand.u32 %s71, 1
        %s214 = scalar_lea.sflag [#allocation4], %s213
        %s215 = sand.u32 %s71, 1
        %s216 = smul.addr %s215, 512
        %s217 = scalar_lea.vmem [#allocation3], %s216
        // Predicated region
        $region33: #{_lambda_.3} parent=31 // pred_check
          %p218 = pneg %p84
        $region34: #{_lambda_.3} parent=31 // pred_check_branch
          %220 = sbr.rel (%p218) target = $region36
        $region35: #{_lambda_.3} parent=31 // pred_region
          %222 = dma.done %s214, 8192
        $region36: #{_lambda_.3} parent=31 // pred_fallthru
          _
        %s223 = sand.u32 %s97, 1
        %s224 = scalar_lea.sflag [#allocation7], %s223
        %s225 = sand.u32 %s97, 1
        %s226 = smul.addr %s225, 4
        %s227 = scalar_lea.vmem [#allocation6], %s226
        // Predicated region
        $region37: #{_lambda_.3} parent=31 // pred_check
          %p228 = pneg %p110
        $region38: #{_lambda_.3} parent=31 // pred_check_branch
          %230 = sbr.rel (%p228) target = $region40
        $region39: #{_lambda_.3} parent=31 // pred_region
          %232 = dma.done %s224, 64
        $region40: #{_lambda_.3} parent=31 // pred_fallthru
          _
        %p233 = scmp.lt.s32.totalorder %s28, 1
        %s234 = scalar_select %p233, %s28, 1
        %s235 = smul.addr %s234, 2
        %s236 = scalar_lea.vmem %s0, %s235
        %p237 = pneg %p56
        %p238 = pneg %p53
        %s239 = sand.u32 %s71, 1
        %s240 = scalar_lea.sflag [#allocation4], %s239
        %s241 = sand.u32 %s71, 1
        %s242 = smul.addr %s241, 512
        %s243 = scalar_lea.vmem [#allocation3], %s242
        %p244 = pneg %p84
        %p245 = pneg %p81
        %s246 = sand.u32 %s97, 1
        %s247 = scalar_lea.sflag [#allocation7], %s246
        %s248 = sand.u32 %s97, 1
        %s249 = smul.addr %s248, 4
        %s250 = scalar_lea.vmem [#allocation6], %s249
        %p251 = pneg %p110
        %p252 = pneg %p107
        %p253 = pneg %p136
        %p254 = pneg %p133
        %s255 = sand.u32 %s123, 1
        %s256 = scalar_lea.sflag [#allocation5], %s255
        %s257 = sand.u32 %s123, 1
        %s258 = smul.addr %s257, 8
        %s259 = scalar_lea.vmem [#allocation8], %s258
        %p260 = scmp.lt.s32.totalorder %s28, 1
        %s261 = scalar_select %p260, %s28, 1
        %s262 = smul.addr %s261, 2
        %s263 = scalar_lea.vmem %s0, %s262
        %s264 = smul.u32 16, %s28
        %s265 = smul.u32 4, %s27
        %s266 = smul.u32 4, %s27
        %s267 = smul.u32 4, %s27
        %p268 = scmp.eq.s32.totalorder %s28, 0
        // Predicated region
        $region41: #{_lambda_.3} parent=31 // pred_check
          %p269 = pneg %p268
        $region42: #{_lambda_.3} parent=31 // pred_check_branch
          %271 = sbr.rel (%p269) target = $region44
        $region43: #{_lambda_.3} parent=31 // pred_region
          %272 = vst [vmem:[#allocation2] sm:$0xff] 0.0
        $region44: #{_lambda_.3} parent=31 // pred_fallthru
          _
        %v273 = vld [vmem:[#allocation2] sm:$0xff]
        %v274 = vld [vmem:[%s263] sm:$0x3]
        %v275 = vld [vmem:[%s217] sm:$0xff]
        %v276 = vld [vmem:[%s217 + $0x8] sm:$0xff]
        %v277 = vld [vmem:[%s217 + $0x10] sm:$0xff]
        %v278 = vld [vmem:[%s217 + $0x18] sm:$0xff]
        %v279 = vld [vmem:[%s217 + $0x20] sm:$0xff]
        %v280 = vld [vmem:[%s217 + $0x28] sm:$0xff]
        %v281 = vld [vmem:[%s217 + $0x30] sm:$0xff]
        %v282 = vld [vmem:[%s217 + $0x38] sm:$0xff]
        %v283 = vld [vmem:[%s217 + $0x40] sm:$0xff]
        %v284 = vld [vmem:[%s217 + $0x48] sm:$0xff]
        %v285 = vld [vmem:[%s217 + $0x50] sm:$0xff]
        %v286 = vld [vmem:[%s217 + $0x58] sm:$0xff]
        %v287 = vld [vmem:[%s217 + $0x60] sm:$0xff]
        %v288 = vld [vmem:[%s217 + $0x68] sm:$0xff]
        %v289 = vld [vmem:[%s217 + $0x70] sm:$0xff]
        %v290 = vld [vmem:[%s217 + $0x78] sm:$0xff]
        %v291 = vld [vmem:[%s217 + $0x80] sm:$0xff]
        %v292 = vld [vmem:[%s217 + $0x88] sm:$0xff]
        %v293 = vld [vmem:[%s217 + $0x90] sm:$0xff]
        %v294 = vld [vmem:[%s217 + $0x98] sm:$0xff]
        %v295 = vld [vmem:[%s217 + $0xa0] sm:$0xff]
        %v296 = vld [vmem:[%s217 + $0xa8] sm:$0xff]
        %v297 = vld [vmem:[%s217 + $0xb0] sm:$0xff]
        %v298 = vld [vmem:[%s217 + $0xb8] sm:$0xff]
        %v299 = vld [vmem:[%s217 + $0xc0] sm:$0xff]
        %v300 = vld [vmem:[%s217 + $0xc8] sm:$0xff]
        %v301 = vld [vmem:[%s217 + $0xd0] sm:$0xff]
        %v302 = vld [vmem:[%s217 + $0xd8] sm:$0xff]
        %v303 = vld [vmem:[%s217 + $0xe0] sm:$0xff]
        %v304 = vld [vmem:[%s217 + $0xe8] sm:$0xff]
        %v305 = vld [vmem:[%s217 + $0xf0] sm:$0xff]
        %v306 = vld [vmem:[%s217 + $0xf8] sm:$0xff]
        %v307 = vld [vmem:[%s217 + $0x100] sm:$0xff]
        %v308 = vld [vmem:[%s217 + $0x108] sm:$0xff]
        %v309 = vld [vmem:[%s217 + $0x110] sm:$0xff]
        %v310 = vld [vmem:[%s217 + $0x118] sm:$0xff]
        %v311 = vld [vmem:[%s217 + $0x120] sm:$0xff]
        %v312 = vld [vmem:[%s217 + $0x128] sm:$0xff]
        %v313 = vld [vmem:[%s217 + $0x130] sm:$0xff]
        %v314 = vld [vmem:[%s217 + $0x138] sm:$0xff]
        %v315 = vld [vmem:[%s217 + $0x140] sm:$0xff]
        %v316 = vld [vmem:[%s217 + $0x148] sm:$0xff]
        %v317 = vld [vmem:[%s217 + $0x150] sm:$0xff]
        %v318 = vld [vmem:[%s217 + $0x158] sm:$0xff]
        %v319 = vld [vmem:[%s217 + $0x160] sm:$0xff]
        %v320 = vld [vmem:[%s217 + $0x168] sm:$0xff]
        %v321 = vld [vmem:[%s217 + $0x170] sm:$0xff]
        %v322 = vld [vmem:[%s217 + $0x178] sm:$0xff]
        %v323 = vld [vmem:[%s217 + $0x180] sm:$0xff]
        %v324 = vld [vmem:[%s217 + $0x188] sm:$0xff]
        %v325 = vld [vmem:[%s217 + $0x190] sm:$0xff]
        %v326 = vld [vmem:[%s217 + $0x198] sm:$0xff]
        %v327 = vld [vmem:[%s217 + $0x1a0] sm:$0xff]
        %v328 = vld [vmem:[%s217 + $0x1a8] sm:$0xff]
        %v329 = vld [vmem:[%s217 + $0x1b0] sm:$0xff]
        %v330 = vld [vmem:[%s217 + $0x1b8] sm:$0xff]
        %v331 = vld [vmem:[%s217 + $0x1c0] sm:$0xff]
        %v332 = vld [vmem:[%s217 + $0x1c8] sm:$0xff]
        %v333 = vld [vmem:[%s217 + $0x1d0] sm:$0xff]
        %v334 = vld [vmem:[%s217 + $0x1d8] sm:$0xff]
        %v335 = vld [vmem:[%s217 + $0x1e0] sm:$0xff]
        %v336 = vld [vmem:[%s217 + $0x1e8] sm:$0xff]
        %v337 = vld [vmem:[%s217 + $0x1f0] sm:$0xff]
        %v338 = vld [vmem:[%s217 + $0x1f8] sm:$0xff]
        %339 = vmatpush.msra.mxu0 %v335
        %340 = vmatpush.msra.mxu0 %v331
        %341 = vmatpush.msra.mxu0 %v327
        %342 = vmatpush.msra.mxu0 %v323
        %343 = vmatpush.msra.mxu0 %v319
        %344 = vmatpush.msra.mxu0 %v315
        %345 = vmatpush.msra.mxu0 %v311
        %346 = vmatpush.msra.mxu0 %v307
        %347 = vmatpush.msra.mxu0 %v303
        %348 = vmatpush.msra.mxu0 %v299
        %349 = vmatpush.msra.mxu0 %v295
        %350 = vmatpush.msra.mxu0 %v291
        %351 = vmatpush.msra.mxu0 %v287
        %352 = vmatpush.msra.mxu0 %v283
        %353 = vmatpush.msra.mxu0 %v279
        %354 = vmatpush.msra.mxu0 %v275
        %355 = vmatmul.f32.gmra.mxu0 %v274
        %v356 = vpop.f32.mrf.mxu0
        %v357 = vadd.f32 0.0, %v356
        %358 = vdwg.mxu0
        %359 = vmatpush.msra.mxu0 %v336
        %360 = vmatpush.msra.mxu0 %v332
        %361 = vmatpush.msra.mxu0 %v328
        %362 = vmatpush.msra.mxu0 %v324
        %363 = vmatpush.msra.mxu0 %v320
        %364 = vmatpush.msra.mxu0 %v316
        %365 = vmatpush.msra.mxu0 %v312
        %366 = vmatpush.msra.mxu0 %v308
        %367 = vmatpush.msra.mxu0 %v304
        %368 = vmatpush.msra.mxu0 %v300
        %369 = vmatpush.msra.mxu0 %v296
        %370 = vmatpush.msra.mxu0 %v292
        %371 = vmatpush.msra.mxu0 %v288
        %372 = vmatpush.msra.mxu0 %v284
        %373 = vmatpush.msra.mxu0 %v280
        %374 = vmatpush.msra.mxu0 %v276
        %375 = vmatmul.f32.gmra.mxu0 %v274
        %v376 = vpop.f32.mrf.mxu0
        %v377 = vadd.f32 0.0, %v376
        %378 = vdwg.mxu0
        %379 = vmatpush.msra.mxu0 %v337
        %380 = vmatpush.msra.mxu0 %v333
        %381 = vmatpush.msra.mxu0 %v329
        %382 = vmatpush.msra.mxu0 %v325
        %383 = vmatpush.msra.mxu0 %v321
        %384 = vmatpush.msra.mxu0 %v317
        %385 = vmatpush.msra.mxu0 %v313
        %386 = vmatpush.msra.mxu0 %v309
        %387 = vmatpush.msra.mxu0 %v305
        %388 = vmatpush.msra.mxu0 %v301
        %389 = vmatpush.msra.mxu0 %v297
        %390 = vmatpush.msra.mxu0 %v293
        %391 = vmatpush.msra.mxu0 %v289
        %392 = vmatpush.msra.mxu0 %v285
        %393 = vmatpush.msra.mxu0 %v281
        %394 = vmatpush.msra.mxu0 %v277
        %395 = vmatmul.f32.gmra.mxu0 %v274
        %v396 = vpop.f32.mrf.mxu0
        %v397 = vadd.f32 0.0, %v396
        %398 = vdwg.mxu0
        %399 = vmatpush.msra.mxu0 %v338
        %400 = vmatpush.msra.mxu0 %v334
        %401 = vmatpush.msra.mxu0 %v330
        %402 = vmatpush.msra.mxu0 %v326
        %403 = vmatpush.msra.mxu0 %v322
        %404 = vmatpush.msra.mxu0 %v318
        %405 = vmatpush.msra.mxu0 %v314
        %406 = vmatpush.msra.mxu0 %v310
        %407 = vmatpush.msra.mxu0 %v306
        %408 = vmatpush.msra.mxu0 %v302
        %409 = vmatpush.msra.mxu0 %v298
        %410 = vmatpush.msra.mxu0 %v294
        %411 = vmatpush.msra.mxu0 %v290
        %412 = vmatpush.msra.mxu0 %v286
        %413 = vmatpush.msra.mxu0 %v282
        %414 = vmatpush.msra.mxu0 %v278
        %415 = vmatmul.f32.gmra.mxu0 %v274
        %v416 = vpop.f32.mrf.mxu0
        %v417 = vadd.f32 0.0, %v416
        %418 = vdwg.mxu0
        %v423 = vrot.slane %v377, 6
        %v424 = vrot.slane %v397, 4
        %v425 = vrot.slane %v417, 2
        %vm426 = vcmask 1041408
        %v427 = vsel %vm426, %v357, %v423
        %vm428 = vcmask 1045508
        %v429 = vsel %vm428, %v424, %v425
        %vm430 = vcmask 1043456
        %v431 = vsel %vm430, %v427, %v429
        %v433 = vadd.f32 %v273, %v431
        %434 = vst [vmem:[#allocation2] sm:$0xff] %v433
        %p435 = scmp.eq.s32.totalorder %s28, 1
        // Predicated region
        $region45: #{_lambda_.3} parent=31 // pred_check
          %p436 = pneg %p435
        $region46: #{_lambda_.3} parent=31 // pred_check_branch
          %438 = sbr.rel (%p436) target = $region48
        $region47: #{_lambda_.3} parent=31 // pred_region
          %v439 = vld [vmem:[#allocation2] sm:$0xff]
          %v440 = vld [vmem:[%s227] sm:$0xf]
          %v442 = vperm.slane %v440, 0
          %v443 = vperm.slane %v440, 1
          %v444 = vperm.slane %v440, 2
          %v445 = vperm.slane %v440, 3
          %v446 = vrot.slane %v443, 6
          %v447 = vrot.slane %v444, 4
          %v448 = vrot.slane %v445, 2
          %v449 = vsel %vm426, %v442, %v446
          %v450 = vsel %vm428, %v447, %v448
          %v451 = vsel %vm430, %v449, %v450
          %v453 = vadd.f32 %v439, %v451
          %454 = vst [vmem:[%s259] sm:$0xff] %v453
        $region48: #{_lambda_.3} parent=31 // pred_fallthru
          _
        %s455 = sand.u32 %s123, 1
        %s456 = scalar_lea.sflag [#allocation5], %s455
        %s457 = sand.u32 %s123, 1
        %s458 = smul.addr %s457, 8
        %s459 = scalar_lea.vmem [#allocation8], %s458
        // Predicated region
        $region49: #{_lambda_.3} parent=31 // pred_check
          %p460 = pneg %p133
        $region50: #{_lambda_.3} parent=31 // pred_check_branch
          %462 = sbr.rel (%p460) target = $region52
        $region51: #{_lambda_.3} parent=31 // pred_region
          %s463 = smul.u32 4, %s27
          %465 = vsyncadd %s456, 0
          %s466 = smul.addr %s463, 2
          %s467 = scalar_lea.hbm %s3, %s466
          %s469 = sshll.u32 %s459, 4
          %s470 = int_to_ptr.vmem [resolvable:$true] %s469
          %s471 = sshll.u32 %s467, 4
          %s472 = int_to_ptr.hbm [resolvable:$true] %s471
          %474 = dma.vmem_to_hbm [thread:$0]  %s470, 128, %s472, %s456
        $region52: #{_lambda_.3} parent=31 // pred_fallthru
          _
      $region32: #{_lambda_.3} parent=5 // pred_fallthru
        _
      %p475 = scmp.le.s32.totalorder 2, %s18
      // Predicated region
      $region53: #{_lambda_.3} parent=5 // pred_check
        %p476 = pneg %p475
      $region54: #{_lambda_.3} parent=5 // pred_check_branch
        %478 = sbr.rel (%p476) target = $region56
      $region55: #{_lambda_.3} parent=5 // pred_region
        %s479 = ssub.s32 %s18, 2
        // Predicated region
        $region57: #{_lambda_.3} parent=55 // pred_check
          %p480 = pneg %p139
        $region58: #{_lambda_.3} parent=55 // pred_check_branch
          %482 = sbr.rel (%p480) target = $region60
        $region59: #{_lambda_.3} parent=55 // pred_region
          %s483 = sand.u32 %s124, 1
          %s484 = scalar_lea.sflag [#allocation5], %s483
          %s485 = sand.u32 %s124, 1
          %s486 = smul.addr %s485, 8
          %s487 = scalar_lea.vmem [#allocation8], %s486
          %489 = dma.done %s484, 128
        $region60: #{_lambda_.3} parent=55 // pred_fallthru
          _
      $region56: #{_lambda_.3} parent=5 // pred_fallthru
        _
    $region6: #{_lambda_.3} parent=1 // loop_footer
      %s22 = sadd.s32 1, %s18
    $region7: #{_lambda_.3} parent=1 // loop_footer_branch
      %17 = sbr.rel target = $region3
    $region8: #{_lambda_.3} parent=1 // loop_exit
      _
    %490 = vsyncpa [#allocation4], 1
    %s491 = scalar_lea.sflag [#allocation4], 1
    %492 = vsyncpa %s491, 1
    %493 = vsyncpa [#allocation7], 1
    %s494 = scalar_lea.sflag [#allocation7], 1
    %495 = vsyncpa %s494, 1
    %496 = vsyncpa [#allocation5], 1
    %s497 = scalar_lea.sflag [#allocation5], 1
    %498 = vsyncpa %s497, 1

// kernel: _lambda_.2
$region0: #{_lambda_.2}
  #allocation0 [shape = 'u32[]', space=smem, size = 0x4, offset = 0x4, fixed_abs, tag = 'smem constant byte address 0x4 - core index']
  #allocation1 [shape = 'u32[72,128]{1,0:T(1,128)}', space=vmem, size = 0x9000, scoped, tag = 'internal scratch']
  #allocation2 [shape = 'f32[2,2,64]{2,1,0:T(2,128)}', space=vmem, size = 0x800, scoped, tag = 'scratch operand']
  #allocation3 [shape = 'f32[2,4,64]{2,1,0:T(4,128)}', space=vmem, size = 0x1000, scoped, tag = 'scratch operand']
  #allocation4 [shape = 'f32[2,8,32]{2,1,0:T(8,128)}', space=vmem, size = 0x2000, scoped, tag = 'scratch operand']
  %s0 = inlined_call_operand.hbm [shape: f32[2,1,38], index: 0, kind: input, shape index: {}]
  %s1 = inlined_call_operand.hbm [shape: f32[38,128], index: 1, kind: input, shape index: {}]
  %s2 = inlined_call_operand.hbm [shape: f32[1,128], index: 2, kind: input, shape index: {}]
  %s3 = inlined_call_operand.hbm [shape: f32[64,128], index: 3, kind: input, shape index: {}]
  %s4 = inlined_call_operand.hbm [shape: f32[1,128], index: 4, kind: input, shape index: {}]
  %s5 = inlined_call_operand.hbm [shape: f32[64,64], index: 5, kind: input, shape index: {}]
  %s6 = inlined_call_operand.hbm [shape: f32[1,64], index: 6, kind: input, shape index: {}]
  %s7 = inlined_call_operand.hbm [shape: f32[32,32], index: 7, kind: input, shape index: {}]
  %s8 = inlined_call_operand.hbm [shape: f32[1,32], index: 8, kind: input, shape index: {}]
  %s9 = inlined_call_operand.vmem [shape: f32[2,16,16], index: 9, kind: output, shape index: {}]
  %s10 = sld [smem:[#allocation0]]
  $region82: #{_lambda_.2} parent=0
    _
  %s12 = ssub.s32 1, %s10
  %s13 = scalar_select 0, %s12, %s10
  $region1: #{_lambda_.2} parent=0
    #allocation5 [shape = 'u8[1024]{0}', space=vmem, size = 0x400, scoped, tag = 'input window, operand 0, single buffered']
    #allocation6 [shape = 's32[1]{0}', space=sflag, size = 0x4, scoped, tag = 'scoped memory for _lambda_.2']
    #allocation7 [shape = 'u8[20480]{0}', space=vmem, size = 0x5000, scoped, tag = 'input window, operand 1, single buffered']
    #allocation8 [shape = 's32[1]{0}', space=sflag, size = 0x4, scoped, tag = 'scoped memory for _lambda_.2']
    #allocation9 [shape = 'u8[512]{0}', space=vmem, size = 0x400, scoped, tag = 'input window, operand 2, single buffered']
    #allocation10 [shape = 'u8[32768]{0}', space=vmem, size = 0x8000, scoped, tag = 'input window, operand 3, single buffered']
    #allocation11 [shape = 's32[1]{0}', space=sflag, size = 0x4, scoped, tag = 'scoped memory for _lambda_.2']
    #allocation12 [shape = 'u8[512]{0}', space=vmem, size = 0x400, scoped, tag = 'input window, operand 4, single buffered']
    #allocation13 [shape = 'u8[32768]{0}', space=vmem, size = 0x8000, scoped, tag = 'input window, operand 5, single buffered']
    #allocation14 [shape = 's32[1]{0}', space=sflag, size = 0x4, scoped, tag = 'scoped memory for _lambda_.2']
    #allocation15 [shape = 'u8[512]{0}', space=vmem, size = 0x400, scoped, tag = 'input window, operand 6, single buffered']
    #allocation16 [shape = 'u8[16384]{0}', space=vmem, size = 0x4000, scoped, tag = 'input window, operand 7, single buffered']
    #allocation17 [shape = 's32[1]{0}', space=sflag, size = 0x4, scoped, tag = 'scoped memory for _lambda_.2']
    #allocation18 [shape = 'u8[512]{0}', space=vmem, size = 0x400, scoped, tag = 'input window, operand 8, single buffered']
    %14 = vsyncpa [#allocation6], 0
    %15 = vsyncpa [#allocation8], 0
    %16 = vsyncpa [#allocation11], 0
    %17 = vsyncpa [#allocation14], 0
    %18 = vsyncpa [#allocation17], 0
    // Predicated region
    $region2: #{_lambda_.2} parent=1 // pred_check
      _
    $region3: #{_lambda_.2} parent=1 // pred_check_branch
      %20 = sbr.rel (0) target = $region5
    $region4: #{_lambda_.2} parent=1 // pred_region
      %22 = vsyncadd [#allocation6], 0
      %s23 = sshll.u32 %s0, 4
      %s24 = int_to_ptr.hbm [resolvable:$true] %s23
      %s25 = sshll.u32 [#allocation5], 4
      %s26 = int_to_ptr.vmem [resolvable:$true] %s25
      %31 = dma.hbm_to_vmem [thread:$0]  %s24, 32, %s26, [#allocation6], 16, 16, 1
    $region5: #{_lambda_.2} parent=1 // pred_fallthru
      _
    // Predicated region
    $region6: #{_lambda_.2} parent=1 // pred_check
      _
    $region7: #{_lambda_.2} parent=1 // pred_check_branch
      %33 = sbr.rel (0) target = $region9
    $region8: #{_lambda_.2} parent=1 // pred_region
      %35 = vsyncadd [#allocation8], 0
      %s36 = sshll.u32 %s1, 4
      %s37 = int_to_ptr.hbm [resolvable:$true] %s36
      %s38 = sshll.u32 [#allocation7], 4
      %s39 = int_to_ptr.vmem [resolvable:$true] %s38
      %44 = dma.hbm_to_vmem [thread:$0]  %s37, 640, %s39, [#allocation8], 128, 128, 8
    $region9: #{_lambda_.2} parent=1 // pred_fallthru
      _
    // Predicated region
    $region10: #{_lambda_.2} parent=1 // pred_check
      _
    $region11: #{_lambda_.2} parent=1 // pred_check_branch
      %46 = sbr.rel (0) target = $region13
    $region12: #{_lambda_.2} parent=1 // pred_region
      %48 = vsyncadd [#allocation8], 0
      %s50 = sshll.u32 %s2, 4
      %s51 = int_to_ptr.hbm [resolvable:$true] %s50
      %s52 = sshll.u32 [#allocation9], 4
      %s53 = int_to_ptr.vmem [resolvable:$true] %s52
      %55 = dma.hbm_to_vmem [thread:$0]  %s51, 16, %s53, [#allocation8]
    $region13: #{_lambda_.2} parent=1 // pred_fallthru
      _
    // Predicated region
    $region14: #{_lambda_.2} parent=1 // pred_check
      _
    $region15: #{_lambda_.2} parent=1 // pred_check_branch
      %57 = sbr.rel (0) target = $region17
    $region16: #{_lambda_.2} parent=1 // pred_region
      %59 = vsyncadd [#allocation11], 0
      %s60 = sshll.u32 %s3, 4
      %s61 = int_to_ptr.hbm [resolvable:$true] %s60
      %s62 = sshll.u32 [#allocation10], 4
      %s63 = int_to_ptr.vmem [resolvable:$true] %s62
      %68 = dma.hbm_to_vmem [thread:$0]  %s61, 1024, %s63, [#allocation11], 128, 128, 8
    $region17: #{_lambda_.2} parent=1 // pred_fallthru
      _
    // Predicated region
    $region18: #{_lambda_.2} parent=1 // pred_check
      _
    $region19: #{_lambda_.2} parent=1 // pred_check_branch
      %70 = sbr.rel (0) target = $region21
    $region20: #{_lambda_.2} parent=1 // pred_region
      %72 = vsyncadd [#allocation11], 0
      %s74 = sshll.u32 %s4, 4
      %s75 = int_to_ptr.hbm [resolvable:$true] %s74
      %s76 = sshll.u32 [#allocation12], 4
      %s77 = int_to_ptr.vmem [resolvable:$true] %s76
      %79 = dma.hbm_to_vmem [thread:$0]  %s75, 16, %s77, [#allocation11]
    $region21: #{_lambda_.2} parent=1 // pred_fallthru
      _
    // Predicated region
    $region22: #{_lambda_.2} parent=1 // pred_check
      _
    $region23: #{_lambda_.2} parent=1 // pred_check_branch
      %81 = sbr.rel (0) target = $region25
    $region24: #{_lambda_.2} parent=1 // pred_region
      %83 = vsyncadd [#allocation14], 0
      %s84 = sshll.u32 %s5, 4
      %s85 = int_to_ptr.hbm [resolvable:$true] %s84
      %s86 = sshll.u32 [#allocation13], 4
      %s87 = int_to_ptr.vmem [resolvable:$true] %s86
      %92 = dma.hbm_to_vmem [thread:$0]  %s85, 1024, %s87, [#allocation14], 128, 128, 8
    $region25: #{_lambda_.2} parent=1 // pred_fallthru
      _
    // Predicated region
    $region26: #{_lambda_.2} parent=1 // pred_check
      _
    $region27: #{_lambda_.2} parent=1 // pred_check_branch
      %94 = sbr.rel (0) target = $region29
    $region28: #{_lambda_.2} parent=1 // pred_region
      %96 = vsyncadd [#allocation14], 0
      %s98 = sshll.u32 %s6, 4
      %s99 = int_to_ptr.hbm [resolvable:$true] %s98
      %s100 = sshll.u32 [#allocation15], 4
      %s101 = int_to_ptr.vmem [resolvable:$true] %s100
      %103 = dma.hbm_to_vmem [thread:$0]  %s99, 16, %s101, [#allocation14]
    $region29: #{_lambda_.2} parent=1 // pred_fallthru
      _
    // Predicated region
    $region30: #{_lambda_.2} parent=1 // pred_check
      _
    $region31: #{_lambda_.2} parent=1 // pred_check_branch
      %105 = sbr.rel (0) target = $region33
    $region32: #{_lambda_.2} parent=1 // pred_region
      %107 = vsyncadd [#allocation17], 0
      %s108 = sshll.u32 %s7, 4
      %s109 = int_to_ptr.hbm [resolvable:$true] %s108
      %s110 = sshll.u32 [#allocation16], 4
      %s111 = int_to_ptr.vmem [resolvable:$true] %s110
      %116 = dma.hbm_to_vmem [thread:$0]  %s109, 512, %s111, [#allocation17], 128, 128, 8
    $region33: #{_lambda_.2} parent=1 // pred_fallthru
      _
    // Predicated region
    $region34: #{_lambda_.2} parent=1 // pred_check
      _
    $region35: #{_lambda_.2} parent=1 // pred_check_branch
      %118 = sbr.rel (0) target = $region37
    $region36: #{_lambda_.2} parent=1 // pred_region
      %120 = vsyncadd [#allocation17], 0
      %s122 = sshll.u32 %s8, 4
      %s123 = int_to_ptr.hbm [resolvable:$true] %s122
      %s124 = sshll.u32 [#allocation18], 4
      %s125 = int_to_ptr.vmem [resolvable:$true] %s124
      %127 = dma.hbm_to_vmem [thread:$0]  %s123, 16, %s125, [#allocation17]
    $region37: #{_lambda_.2} parent=1 // pred_fallthru
      _
    // Predicated region
    $region38: #{_lambda_.2} parent=1 // pred_check
      _
    $region39: #{_lambda_.2} parent=1 // pred_check_branch
      %129 = sbr.rel (0) target = $region41
    $region40: #{_lambda_.2} parent=1 // pred_region
      %131 = dma.done [#allocation6], 32
    $region41: #{_lambda_.2} parent=1 // pred_fallthru
      _
    // Predicated region
    $region42: #{_lambda_.2} parent=1 // pred_check
      _
    $region43: #{_lambda_.2} parent=1 // pred_check_branch
      %133 = sbr.rel (0) target = $region45
    $region44: #{_lambda_.2} parent=1 // pred_region
      %135 = dma.done [#allocation8], 640
    $region45: #{_lambda_.2} parent=1 // pred_fallthru
      _
    // Predicated region
    $region46: #{_lambda_.2} parent=1 // pred_check
      _
    $region47: #{_lambda_.2} parent=1 // pred_check_branch
      %137 = sbr.rel (0) target = $region49
    $region48: #{_lambda_.2} parent=1 // pred_region
      %139 = dma.done [#allocation8], 16
    $region49: #{_lambda_.2} parent=1 // pred_fallthru
      _
    // Predicated region
    $region50: #{_lambda_.2} parent=1 // pred_check
      _
    $region51: #{_lambda_.2} parent=1 // pred_check_branch
      %141 = sbr.rel (0) target = $region53
    $region52: #{_lambda_.2} parent=1 // pred_region
      %143 = dma.done [#allocation11], 1024
    $region53: #{_lambda_.2} parent=1 // pred_fallthru
      _
    // Predicated region
    $region54: #{_lambda_.2} parent=1 // pred_check
      _
    $region55: #{_lambda_.2} parent=1 // pred_check_branch
      %145 = sbr.rel (0) target = $region57
    $region56: #{_lambda_.2} parent=1 // pred_region
      %147 = dma.done [#allocation11], 16
    $region57: #{_lambda_.2} parent=1 // pred_fallthru
      _
    // Predicated region
    $region58: #{_lambda_.2} parent=1 // pred_check
      _
    $region59: #{_lambda_.2} parent=1 // pred_check_branch
      %149 = sbr.rel (0) target = $region61
    $region60: #{_lambda_.2} parent=1 // pred_region
      %151 = dma.done [#allocation14], 1024
    $region61: #{_lambda_.2} parent=1 // pred_fallthru
      _
    // Predicated region
    $region62: #{_lambda_.2} parent=1 // pred_check
      _
    $region63: #{_lambda_.2} parent=1 // pred_check_branch
      %153 = sbr.rel (0) target = $region65
    $region64: #{_lambda_.2} parent=1 // pred_region
      %155 = dma.done [#allocation14], 16
    $region65: #{_lambda_.2} parent=1 // pred_fallthru
      _
    // Predicated region
    $region66: #{_lambda_.2} parent=1 // pred_check
      _
    $region67: #{_lambda_.2} parent=1 // pred_check_branch
      %157 = sbr.rel (0) target = $region69
    $region68: #{_lambda_.2} parent=1 // pred_region
      %159 = dma.done [#allocation17], 512
    $region69: #{_lambda_.2} parent=1 // pred_fallthru
      _
    // Predicated region
    $region70: #{_lambda_.2} parent=1 // pred_check
      _
    $region71: #{_lambda_.2} parent=1 // pred_check_branch
      %161 = sbr.rel (0) target = $region73
    $region72: #{_lambda_.2} parent=1 // pred_region
      %163 = dma.done [#allocation17], 16
    $region73: #{_lambda_.2} parent=1 // pred_fallthru
      _
    %v164 = vld [vmem:[#allocation5] sm:$0x1]
    %v165 = vld [vmem:[#allocation7] sm:$0xff]
    %v166 = vld [vmem:[#allocation7 + $0x8] sm:$0xff]
    %v167 = vld [vmem:[#allocation7 + $0x10] sm:$0xff]
    %v168 = vld [vmem:[#allocation7 + $0x18] sm:$0xff]
    %v169 = vld [vmem:[#allocation7 + $0x20] sm:$0x3f]
    %v170 = vld [vmem:[#allocation9] sm:$0x1]
    %vm171 = vcmask 310272
    %v173 = vsel %vm171, %v164, 0
    %vm175 = vcmask 1045504
    %v177 = vsel %vm175, %v169, 0
    %179 = vmatpush.msra.mxu0 0.0
    %180 = vmatpush.msra.mxu0 0.0
    %181 = vmatpush.msra.mxu0 0.0
    %182 = vmatpush.msra.mxu0 0.0
    %183 = vmatpush.msra.mxu0 0.0
    %184 = vmatpush.msra.mxu0 0.0
    %185 = vmatpush.msra.mxu0 0.0
    %186 = vmatpush.msra.mxu0 0.0
    %187 = vmatpush.msra.mxu0 0.0
    %188 = vmatpush.msra.mxu0 0.0
    %189 = vmatpush.msra.mxu0 0.0
    %190 = vmatpush.msra.mxu0 %v177
    %191 = vmatpush.msra.mxu0 %v168
    %192 = vmatpush.msra.mxu0 %v167
    %193 = vmatpush.msra.mxu0 %v166
    %194 = vmatpush.msra.mxu0 %v165
    %195 = vmatmul.f32.gmra.mxu0 %v173
    %v196 = vpop.f32.mrf.mxu0
    %v197 = vadd.f32 %v170, %v196
    %198 = vdwg.mxu0
    %v199 = vmax.f32 %v197, 0.0
    %vm200 = vcmask 516096
    %201 = vst.msk [vmem:[#allocation2] sm:$0x1] %vm200, %v199
    %203 = vrot.lane.b32.xlu0 %v199, 64
    %v204 = vpop.permute.xlu0 %203
    %206 = vst.msk [vmem:[#allocation2 + $0x1] sm:$0x1] %vm200, %v204
    %v207 = vld [vmem:[#allocation2] sm:$0x3]
    %v208 = vld [vmem:[#allocation10] sm:$0xff]
    %v209 = vld [vmem:[#allocation10 + $0x8] sm:$0xff]
    %v210 = vld [vmem:[#allocation10 + $0x10] sm:$0xff]
    %v211 = vld [vmem:[#allocation10 + $0x18] sm:$0xff]
    %v212 = vld [vmem:[#allocation10 + $0x20] sm:$0xff]
    %v213 = vld [vmem:[#allocation10 + $0x28] sm:$0xff]
    %v214 = vld [vmem:[#allocation10 + $0x30] sm:$0xff]
    %v215 = vld [vmem:[#allocation10 + $0x38] sm:$0xff]
    %v216 = vld [vmem:[#allocation12] sm:$0x1]
    %v218 = vperm.slane %v216, 0
    %vm220 = vcmask 523264
    %v222 = vsel %vm220, %v207, 0
    %224 = vmatpush.msra.mxu0 0.0
    %225 = vmatpush.msra.mxu0 0.0
    %226 = vmatpush.msra.mxu0 0.0
    %227 = vmatpush.msra.mxu0 0.0
    %228 = vmatpush.msra.mxu0 0.0
    %229 = vmatpush.msra.mxu0 0.0
    %230 = vmatpush.msra.mxu0 0.0
    %231 = vmatpush.msra.mxu0 0.0
    %232 = vmatpush.msra.mxu0 %v215
    %233 = vmatpush.msra.mxu0 %v214
    %234 = vmatpush.msra.mxu0 %v213
    %235 = vmatpush.msra.mxu0 %v212
    %236 = vmatpush.msra.mxu0 %v211
    %237 = vmatpush.msra.mxu0 %v210
    %238 = vmatpush.msra.mxu0 %v209
    %239 = vmatpush.msra.mxu0 %v208
    %240 = vmatmul.f32.gmra.mxu0 %v222
    %v241 = vpop.f32.mrf.mxu0
    %v242 = vadd.f32 %v218, %v241
    %243 = vdwg.mxu0
    %v244 = vmax.f32 %v242, 0.0
    %vm245 = vcmask 517120
    %246 = vst.msk [vmem:[#allocation3] sm:$0x3] %vm245, %v244
    %248 = vrot.lane.b32.xlu0 %v244, 64
    %v249 = vpop.permute.xlu0 %248
    %251 = vst.msk [vmem:[#allocation3 + $0x2] sm:$0x3] %vm245, %v249
    %v252 = vld [vmem:[#allocation3] sm:$0xf]
    %v253 = vld [vmem:[#allocation13] sm:$0xff]
    %v254 = vld [vmem:[#allocation13 + $0x8] sm:$0xff]
    %v255 = vld [vmem:[#allocation13 + $0x10] sm:$0xff]
    %v256 = vld [vmem:[#allocation13 + $0x18] sm:$0xff]
    %v257 = vld [vmem:[#allocation13 + $0x20] sm:$0xff]
    %v258 = vld [vmem:[#allocation13 + $0x28] sm:$0xff]
    %v259 = vld [vmem:[#allocation13 + $0x30] sm:$0xff]
    %v260 = vld [vmem:[#allocation13 + $0x38] sm:$0xff]
    %v261 = vld [vmem:[#allocation15] sm:$0x1]
    %v263 = vperm.slane %v261, 0
    %v266 = vsel %vm220, %v252, 0
    %268 = vmatpush.msra.mxu0 0.0
    %269 = vmatpush.msra.mxu0 0.0
    %270 = vmatpush.msra.mxu0 0.0
    %271 = vmatpush.msra.mxu0 0.0
    %272 = vmatpush.msra.mxu0 0.0
    %273 = vmatpush.msra.mxu0 0.0
    %274 = vmatpush.msra.mxu0 0.0
    %275 = vmatpush.msra.mxu0 0.0
    %276 = vmatpush.msra.mxu0 %v260
    %277 = vmatpush.msra.mxu0 %v259
    %278 = vmatpush.msra.mxu0 %v258
    %279 = vmatpush.msra.mxu0 %v257
    %280 = vmatpush.msra.mxu0 %v256
    %281 = vmatpush.msra.mxu0 %v255
    %282 = vmatpush.msra.mxu0 %v254
    %283 = vmatpush.msra.mxu0 %v253
    %284 = vmatmul.f32.gmra.mxu0 %v266
    %v285 = vpop.f32.mrf.mxu0
    %v286 = vadd.f32 %v263, %v285
    %287 = vdwg.mxu0
    %v288 = vmax.f32 %v286, 0.0
    %vm289 = vcmask 257024
    %290 = vst.msk [vmem:[#allocation4] sm:$0xf] %vm289, %v288
    %292 = vrot.lane.b32.xlu0 %v288, 96
    %v293 = vpop.permute.xlu0 %292
    %295 = vst.msk [vmem:[#allocation4 + $0x4] sm:$0xf] %vm289, %v293
    %v296 = vld [vmem:[#allocation4] sm:$0xff]
    %v297 = vld [vmem:[#allocation16] sm:$0xff]
    %v298 = vld [vmem:[#allocation16 + $0x8] sm:$0xff]
    %v299 = vld [vmem:[#allocation16 + $0x10] sm:$0xff]
    %v300 = vld [vmem:[#allocation16 + $0x18] sm:$0xff]
    %v301 = vld [vmem:[#allocation18] sm:$0x1]
    %v303 = vperm.slane %v301, 0
    %vm305 = vcmask 261120
    %v307 = vsel %vm305, %v296, 0
    %309 = vmatpush.msra.mxu0 0.0
    %310 = vmatpush.msra.mxu0 0.0
    %311 = vmatpush.msra.mxu0 0.0
    %312 = vmatpush.msra.mxu0 0.0
    %313 = vmatpush.msra.mxu0 0.0
    %314 = vmatpush.msra.mxu0 0.0
    %315 = vmatpush.msra.mxu0 0.0
    %316 = vmatpush.msra.mxu0 0.0
    %317 = vmatpush.msra.mxu0 0.0
    %318 = vmatpush.msra.mxu0 0.0
    %319 = vmatpush.msra.mxu0 0.0
    %320 = vmatpush.msra.mxu0 0.0
    %321 = vmatpush.msra.mxu0 %v300
    %322 = vmatpush.msra.mxu0 %v299
    %323 = vmatpush.msra.mxu0 %v298
    %324 = vmatpush.msra.mxu0 %v297
    %325 = vmatmul.f32.gmra.mxu0 %v307
    %v326 = vpop.f32.mrf.mxu0
    %v327 = vadd.f32 %v303, %v326
    %328 = vdwg.mxu0
    %v329 = vmax.f32 %v327, 0.0
    %vm330 = vcmask 130048
    %331 = vst.msk [vmem:[%s9] sm:$0xff] %vm330, %v329
    %333 = vrot.lane.b32.xlu0 %v329, 112
    %v334 = vpop.permute.xlu0 %333
    %336 = vst.msk [vmem:[%s9 + $0x8] sm:$0xff] %vm330, %v334
    %s337 = scalar_lea.vmem [#allocation5], 1
    %v338 = vld [vmem:[%s337] sm:$0x1]
    %v339 = vld [vmem:[#allocation7] sm:$0xff]
    %v340 = vld [vmem:[#allocation7 + $0x8] sm:$0xff]
    %v341 = vld [vmem:[#allocation7 + $0x10] sm:$0xff]
    %v342 = vld [vmem:[#allocation7 + $0x18] sm:$0xff]
    %v343 = vld [vmem:[#allocation7 + $0x20] sm:$0x3f]
    %v344 = vld [vmem:[#allocation9] sm:$0x1]
    %v346 = vsel %vm171, %v338, 0
    %v349 = vsel %vm175, %v343, 0
    %351 = vmatpush.msra.mxu0 0.0
    %352 = vmatpush.msra.mxu0 0.0
    %353 = vmatpush.msra.mxu0 0.0
    %354 = vmatpush.msra.mxu0 0.0
    %355 = vmatpush.msra.mxu0 0.0
    %356 = vmatpush.msra.mxu0 0.0
    %357 = vmatpush.msra.mxu0 0.0
    %358 = vmatpush.msra.mxu0 0.0
    %359 = vmatpush.msra.mxu0 0.0
    %360 = vmatpush.msra.mxu0 0.0
    %361 = vmatpush.msra.mxu0 0.0
    %362 = vmatpush.msra.mxu0 %v349
    %363 = vmatpush.msra.mxu0 %v342
    %364 = vmatpush.msra.mxu0 %v341
    %365 = vmatpush.msra.mxu0 %v340
    %366 = vmatpush.msra.mxu0 %v339
    %367 = vmatmul.f32.gmra.mxu0 %v346
    %v368 = vpop.f32.mrf.mxu0
    %v369 = vadd.f32 %v344, %v368
    %370 = vdwg.mxu0
    %v371 = vmax.f32 %v369, 0.0
    %s372 = scalar_lea.vmem [#allocation2], 2
    %373 = vst.msk [vmem:[%s372] sm:$0x1] %vm200, %v371
    %375 = vrot.lane.b32.xlu0 %v371, 64
    %v376 = vpop.permute.xlu0 %375
    %378 = vst.msk [vmem:[%s372 + $0x1] sm:$0x1] %vm200, %v376
    %v379 = vld [vmem:[%s372] sm:$0x3]
    %v380 = vld [vmem:[#allocation10] sm:$0xff]
    %v381 = vld [vmem:[#allocation10 + $0x8] sm:$0xff]
    %v382 = vld [vmem:[#allocation10 + $0x10] sm:$0xff]
    %v383 = vld [vmem:[#allocation10 + $0x18] sm:$0xff]
    %v384 = vld [vmem:[#allocation10 + $0x20] sm:$0xff]
    %v385 = vld [vmem:[#allocation10 + $0x28] sm:$0xff]
    %v386 = vld [vmem:[#allocation10 + $0x30] sm:$0xff]
    %v387 = vld [vmem:[#allocation10 + $0x38] sm:$0xff]
    %v388 = vld [vmem:[#allocation12] sm:$0x1]
    %v390 = vperm.slane %v388, 0
    %v393 = vsel %vm220, %v379, 0
    %395 = vmatpush.msra.mxu0 0.0
    %396 = vmatpush.msra.mxu0 0.0
    %397 = vmatpush.msra.mxu0 0.0
    %398 = vmatpush.msra.mxu0 0.0
    %399 = vmatpush.msra.mxu0 0.0
    %400 = vmatpush.msra.mxu0 0.0
    %401 = vmatpush.msra.mxu0 0.0
    %402 = vmatpush.msra.mxu0 0.0
    %403 = vmatpush.msra.mxu0 %v387
    %404 = vmatpush.msra.mxu0 %v386
    %405 = vmatpush.msra.mxu0 %v385
    %406 = vmatpush.msra.mxu0 %v384
    %407 = vmatpush.msra.mxu0 %v383
    %408 = vmatpush.msra.mxu0 %v382
    %409 = vmatpush.msra.mxu0 %v381
    %410 = vmatpush.msra.mxu0 %v380
    %411 = vmatmul.f32.gmra.mxu0 %v393
    %v412 = vpop.f32.mrf.mxu0
    %v413 = vadd.f32 %v390, %v412
    %414 = vdwg.mxu0
    %v415 = vmax.f32 %v413, 0.0
    %s416 = scalar_lea.vmem [#allocation3], 4
    %417 = vst.msk [vmem:[%s416] sm:$0x3] %vm245, %v415
    %419 = vrot.lane.b32.xlu0 %v415, 64
    %v420 = vpop.permute.xlu0 %419
    %422 = vst.msk [vmem:[%s416 + $0x2] sm:$0x3] %vm245, %v420
    %v423 = vld [vmem:[%s416] sm:$0xf]
    %v424 = vld [vmem:[#allocation13] sm:$0xff]
    %v425 = vld [vmem:[#allocation13 + $0x8] sm:$0xff]
    %v426 = vld [vmem:[#allocation13 + $0x10] sm:$0xff]
    %v427 = vld [vmem:[#allocation13 + $0x18] sm:$0xff]
    %v428 = vld [vmem:[#allocation13 + $0x20] sm:$0xff]
    %v429 = vld [vmem:[#allocation13 + $0x28] sm:$0xff]
    %v430 = vld [vmem:[#allocation13 + $0x30] sm:$0xff]
    %v431 = vld [vmem:[#allocation13 + $0x38] sm:$0xff]
    %v432 = vld [vmem:[#allocation15] sm:$0x1]
    %v434 = vperm.slane %v432, 0
    %v437 = vsel %vm220, %v423, 0
    %439 = vmatpush.msra.mxu0 0.0
    %440 = vmatpush.msra.mxu0 0.0
    %441 = vmatpush.msra.mxu0 0.0
    %442 = vmatpush.msra.mxu0 0.0
    %443 = vmatpush.msra.mxu0 0.0
    %444 = vmatpush.msra.mxu0 0.0
    %445 = vmatpush.msra.mxu0 0.0
    %446 = vmatpush.msra.mxu0 0.0
    %447 = vmatpush.msra.mxu0 %v431
    %448 = vmatpush.msra.mxu0 %v430
    %449 = vmatpush.msra.mxu0 %v429
    %450 = vmatpush.msra.mxu0 %v428
    %451 = vmatpush.msra.mxu0 %v427
    %452 = vmatpush.msra.mxu0 %v426
    %453 = vmatpush.msra.mxu0 %v425
    %454 = vmatpush.msra.mxu0 %v424
    %455 = vmatmul.f32.gmra.mxu0 %v437
    %v456 = vpop.f32.mrf.mxu0
    %v457 = vadd.f32 %v434, %v456
    %458 = vdwg.mxu0
    %v459 = vmax.f32 %v457, 0.0
    %s460 = scalar_lea.vmem [#allocation4], 8
    %461 = vst.msk [vmem:[%s460] sm:$0xf] %vm289, %v459
    %463 = vrot.lane.b32.xlu0 %v459, 96
    %v464 = vpop.permute.xlu0 %463
    %466 = vst.msk [vmem:[%s460 + $0x4] sm:$0xf] %vm289, %v464
    %v467 = vld [vmem:[%s460] sm:$0xff]
    %v468 = vld [vmem:[#allocation16] sm:$0xff]
    %v469 = vld [vmem:[#allocation16 + $0x8] sm:$0xff]
    %v470 = vld [vmem:[#allocation16 + $0x10] sm:$0xff]
    %v471 = vld [vmem:[#allocation16 + $0x18] sm:$0xff]
    %v472 = vld [vmem:[#allocation18] sm:$0x1]
    %v474 = vperm.slane %v472, 0
    %v477 = vsel %vm305, %v467, 0
    %479 = vmatpush.msra.mxu0 0.0
    %480 = vmatpush.msra.mxu0 0.0
    %481 = vmatpush.msra.mxu0 0.0
    %482 = vmatpush.msra.mxu0 0.0
    %483 = vmatpush.msra.mxu0 0.0
    %484 = vmatpush.msra.mxu0 0.0
    %485 = vmatpush.msra.mxu0 0.0
    %486 = vmatpush.msra.mxu0 0.0
    %487 = vmatpush.msra.mxu0 0.0
    %488 = vmatpush.msra.mxu0 0.0
    %489 = vmatpush.msra.mxu0 0.0
    %490 = vmatpush.msra.mxu0 0.0
    %491 = vmatpush.msra.mxu0 %v471
    %492 = vmatpush.msra.mxu0 %v470
    %493 = vmatpush.msra.mxu0 %v469
    %494 = vmatpush.msra.mxu0 %v468
    %495 = vmatmul.f32.gmra.mxu0 %v477
    %v496 = vpop.f32.mrf.mxu0
    %v497 = vadd.f32 %v474, %v496
    %498 = vdwg.mxu0
    %v499 = vmax.f32 %v497, 0.0
    %s500 = scalar_lea.vmem %s9, 16
    %501 = vst.msk [vmem:[%s500] sm:$0xff] %vm330, %v499
    %503 = vrot.lane.b32.xlu0 %v499, 112
    %v504 = vpop.permute.xlu0 %503
    %506 = vst.msk [vmem:[%s500 + $0x8] sm:$0xff] %vm330, %v504
    // Predicated region
    $region74: #{_lambda_.2} parent=1 // pred_check
      _
    $region75: #{_lambda_.2} parent=1 // pred_check_branch
      %508 = sbr.rel (0) target = $region77
    $region76: #{_lambda_.2} parent=1 // pred_region
      _
    $region77: #{_lambda_.2} parent=1 // pred_fallthru
      _
    // Predicated region
    $region78: #{_lambda_.2} parent=1 // pred_check
      _
    $region79: #{_lambda_.2} parent=1 // pred_check_branch
      %510 = sbr.rel (0) target = $region81
    $region80: #{_lambda_.2} parent=1 // pred_region
      _
    $region81: #{_lambda_.2} parent=1 // pred_fallthru
      _
    %511 = vsyncpa [#allocation6], 1
    %512 = vsyncpa [#allocation8], 1
    %513 = vsyncpa [#allocation11], 1
    %514 = vsyncpa [#allocation14], 1
    %515 = vsyncpa [#allocation17], 1

</llo_original>
